<compile_context>
chip_gen: v5e
topology: v5e:2x2
jax: 0.10.0
libtpu: 0.0.40
codegen_flags: <defaults>
</compile_context>

<pallas_src>
import functools

import jax
import jax.numpy as jnp
from jax.experimental import pallas as pl
from jax.experimental.pallas import tpu as pltpu


_VMEM_DATA_BUDGET = 24 * 1024 * 1024   # per-tile streaming budget (conservative
                                       # across v5e/v6e default scoped + v7x 64MiB)
_VMEM_LIMIT_BYTES = 48 * 1024 * 1024   # explicit scoped-VMEM limit for Mosaic


def _round_up(n, m):
    return ((n + m - 1) // m) * m


def _batch_tiling(B, x_dim, hidden, pack, x_bytes, rec_bytes):
    """Returns (batch_tile_rows, grid_size), derived from a VMEM budget."""
    if B <= 128:
        return B, 1                                   # single full-dim tile
    # Per-row VMEM bytes: double-buffered x and rec streams, enc output tile,
    # plus f32 temporaries (h, h2, logits, mv).
    row_bytes = (2 * x_dim * x_bytes
                 + 2 * x_dim * rec_bytes
                 + 2 * pack * 4
                 + 4 * (2 * hidden + x_dim + pack))
    tb_max = max(64, min(1024, (_VMEM_DATA_BUDGET // row_bytes) // 8 * 8))
    n_tiles = max(2, pl.cdiv(B, tb_max))               # >=2: both v7x TCs + pipeline
    tb = _round_up(pl.cdiv(B, n_tiles), 8)             # multiple of 8 sublanes
    return tb, pl.cdiv(B, tb)                          # ragged last tile OK


# ----------------------------- Pallas kernels ------------------------------

def _bf16_dot(a, w_ref):
    """MXU matmul: activations cast to bf16, bf16 weights, f32 accumulate."""
    return jnp.dot(a.astype(jnp.bfloat16), w_ref[...],
                   preferred_element_type=jnp.float32)


def _encode(x, l, W1x_ref, W1l_ref, b1_ref, Wmv_ref, bmv_ref):
    h = jnp.maximum(
        _bf16_dot(x, W1x_ref) + _bf16_dot(l, W1l_ref)
        + b1_ref[...].astype(jnp.float32), 0.0)
    # fused, lane-dense [mean | log_var | 0...] projection (Wmv padded at init)
    return _bf16_dot(h, Wmv_ref) + bmv_ref[...].astype(jnp.float32)


def vae_encoder_kernel(x_ref, l_ref, W1x_ref, W1l_ref, b1_ref, Wmv_ref, bmv_ref,
                       enc_ref):
    enc_ref[...] = _encode(x_ref[...], l_ref[...], W1x_ref, W1l_ref, b1_ref,
                           Wmv_ref, bmv_ref)


def vae_full_kernel(x_ref, l_ref, eps_ref,
                    W1x_ref, W1l_ref, b1_ref, Wmv_ref, bmv_ref,
                    W2z_ref, W2l_ref, b2_ref, W3_ref, b3_ref,
                    enc_ref, rec_ref, *, latent):
    l = l_ref[...]
    mv = _encode(x_ref[...], l, W1x_ref, W1l_ref, b1_ref, Wmv_ref, bmv_ref)
    mean = mv[:, :latent]
    log_var = mv[:, latent:2 * latent]
    z = mean + jnp.exp(0.5 * log_var) * eps_ref[...].astype(jnp.float32)

    h2 = jnp.maximum(
        _bf16_dot(z, W2z_ref) + _bf16_dot(l, W2l_ref)
        + b2_ref[...].astype(jnp.float32), 0.0)
    logits = _bf16_dot(h2, W3_ref) + b3_ref[...].astype(jnp.float32)

    enc_ref[...] = mv                              # lane-dense [mean|log_var|0..]
    enc_ref[:, 2 * latent:3 * latent] = z          # place z in its packed slot
    rec_ref[...] = jax.nn.sigmoid(logits).astype(rec_ref.dtype)


# ------------------------------ JAX wrappers --------------------------------

def init_vae_params(key, x_dim, l_dim, hidden, latent, dtype=jnp.bfloat16):
    """PyTorch-nn.Linear-style init; weights stored in bf16 (HBM-bound kernel)."""
    def linear(k, fan_in, fan_out):
        kw, kb = jax.random.split(k)
        bound = 1.0 / jnp.sqrt(float(fan_in))
        W = jax.random.uniform(kw, (fan_in, fan_out), jnp.float32, -bound, bound)
        b = jax.random.uniform(kb, (1, fan_out), jnp.float32, -bound, bound)
        return W, b

    k1, k2, k3, k4, k5 = jax.random.split(key, 5)
    W1, b1 = linear(k1, x_dim + l_dim, hidden)
    Wm, bm = linear(k2, hidden, latent)
    Wv, bv = linear(k3, hidden, latent)
    W2, b2 = linear(k4, latent + l_dim, hidden)
    W3, b3 = linear(k5, hidden, x_dim)

    pack = _round_up(3 * latent, 128)              # packed [mean|log_var|z|0] width
    pad_cols = pack - 2 * latent
    p = dict(
        W1x=W1[:x_dim], W1l=W1[x_dim:], b1=b1,                  # no concat(x,l)
        Wmv=jnp.concatenate(                                    # fused + lane-padded
            [Wm, Wv, jnp.zeros((hidden, pad_cols), jnp.float32)], axis=1),
        bmv=jnp.concatenate(
            [bm, bv, jnp.zeros((1, pad_cols), jnp.float32)], axis=1),
        W2z=W2[:latent], W2l=W2[latent:], b2=b2,                # no concat(z,l)
        W3=W3, b3=b3)
    return {k: v.astype(dtype) for k, v in p.items()}


_ENC_W = ("W1x", "W1l", "b1", "Wmv", "bmv")
_DEC_W = ("W2z", "W2l", "b2", "W3", "b3")


@functools.partial(jax.jit, static_argnames=("no_rec", "rec_dtype"))
def vae_inv_forward(params, x, l, b=None, rng_key=None, *, no_rec=False,
                    rec_dtype=jnp.bfloat16):
    """Mirrors VAEInv.forward.  x: [B, C, H, W] (NCHW), l: [B, L]."""
    B = x.shape[0]
    x_flat = x.reshape(B, -1)          # native dtype; kernel casts to bf16 at MXU
    x_dim = params["W1x"].shape[0]
    l_dim = params["W1l"].shape[0]
    hidden = params["b1"].shape[1]
    latent = params["W2z"].shape[0]
    pack = params["Wmv"].shape[1]      # round_up(3*latent, 128) from init
    assert x_flat.shape[1] == x_dim and pack >= 3 * latent

    tb, grid_n = _batch_tiling(B, x_dim, hidden, pack,
                               jnp.dtype(x_flat.dtype).itemsize,
                               jnp.dtype(rec_dtype).itemsize)
    grid = (grid_n,)
    cparams = pltpu.CompilerParams(dimension_semantics=("parallel",),
                                   vmem_limit_bytes=_VMEM_LIMIT_BYTES)

    def bspec(cols):                   # batch-tiled array
        return pl.BlockSpec((tb, cols), lambda i: (i, 0))

    def wspec(w):                      # VMEM-resident weight (DMA'd once)
        return pl.BlockSpec(w.shape, lambda i: (0, 0))

    if no_rec:
        enc = pl.pallas_call(
            vae_encoder_kernel,
            out_shape=jax.ShapeDtypeStruct((B, pack), jnp.float32),
            grid=grid,
            in_specs=[bspec(x_dim), bspec(l_dim)]
                     + [wspec(params[k]) for k in _ENC_W],
            out_specs=bspec(pack),
            compiler_params=cparams,
        )(x_flat, l, *[params[k] for k in _ENC_W])
        return enc[:, :latent], enc[:, latent:2 * latent]

    if b is not None:
        eps = b.astype(jnp.float32)
    else:
        # TODO(synk): in-kernel pltpu.prng_* noise would avoid this tiny extra
        # HBM stream on real hardware, but it does not lower in interpret mode.
        if rng_key is None:
            rng_key = jax.random.PRNGKey(0)
        eps = jax.random.normal(rng_key, (B, latent), jnp.float32)

    weights = [params[k] for k in _ENC_W + _DEC_W]
    enc, rec = pl.pallas_call(
        functools.partial(vae_full_kernel, latent=latent),
        out_shape=(jax.ShapeDtypeStruct((B, pack), jnp.float32),
                   jax.ShapeDtypeStruct((B, x_dim), rec_dtype)),
        grid=grid,
        in_specs=[bspec(x_dim), bspec(l_dim), bspec(latent)]
                 + [wspec(params[k]) for k in _ENC_W + _DEC_W],
        out_specs=(bspec(pack), bspec(x_dim)),
        compiler_params=cparams,
    )(x_flat, l, eps, *weights)

    return (enc[:, :latent], enc[:, latent:2 * latent],
            enc[:, 2 * latent:3 * latent], rec)


# ---------------------------------- main ------------------------------------

if __name__ == "__main__":
    B, C, H, W = 2, 4, 16, 16
    L_DIM, HIDDEN, LATENT = 8, 256, 32

    key = jax.random.PRNGKey(0)
    kx, kl, kb, kp, kr = jax.random.split(key, 5)

    x = jax.random.normal(kx, (B, C, H, W), jnp.float32)   # NCHW input
    l = jax.random.normal(kl, (B, L_DIM), jnp.float32)     # condition / label
    b = jax.random.normal(kb, (B, LATENT), jnp.float32)    # reparam noise ("b")

    params = init_vae_params(kp, C * H * W, L_DIM, HIDDEN, LATENT)

    # full path with externally supplied noise `b`
    mean, log_var, z, rec = vae_inv_forward(params, x, l, b)
    jax.block_until_ready((mean, log_var, z, rec))
    assert mean.shape == (B, LATENT) and log_var.shape == (B, LATENT)
    assert z.shape == (B, LATENT) and rec.shape == (B, C * H * W)
    assert bool(jnp.all(jnp.isfinite(rec.astype(jnp.float32))))
    # reparameterization consistency: z == mean + exp(0.5*log_var) * b
    z_ref = mean + jnp.exp(0.5 * log_var) * b
    assert bool(jnp.allclose(z, z_ref, atol=2e-3, rtol=2e-3))

    # full path with wrapper-generated noise (b=None)
    mean_r, log_var_r, z_r, rec_r = vae_inv_forward(params, x, l, rng_key=kr)
    jax.block_until_ready((mean_r, log_var_r, z_r, rec_r))
    assert z_r.shape == (B, LATENT) and rec_r.shape == (B, C * H * W)
    assert bool(jnp.all(jnp.isfinite(z_r)))
    assert bool(jnp.all(jnp.isfinite(rec_r.astype(jnp.float32))))

    # no_rec path: (mean, log_var) must match the encoder stage of the full path
    mean2, log_var2 = vae_inv_forward(params, x, l, no_rec=True)
    jax.block_until_ready((mean2, log_var2))
    assert bool(jnp.allclose(mean, mean2, atol=1e-5, rtol=1e-5))
    assert bool(jnp.allclose(log_var, log_var2, atol=1e-5, rtol=1e-5))

    print("KERNEL_OK")
</pallas_src>

<mosaic_0001>
module attributes {stable_mosaic.version = 11 : i64} {
  func.func @vae_full_kernel(%arg0: i32, %arg1: memref<2x1024xf32, #tpu.memory_space<vmem>>, %arg2: memref<2x8xf32, #tpu.memory_space<vmem>>, %arg3: memref<2x32xf32, #tpu.memory_space<vmem>>, %arg4: memref<1024x256xbf16, #tpu.memory_space<vmem>>, %arg5: memref<8x256xbf16, #tpu.memory_space<vmem>>, %arg6: memref<1x256xbf16, #tpu.memory_space<vmem>>, %arg7: memref<256x128xbf16, #tpu.memory_space<vmem>>, %arg8: memref<1x128xbf16, #tpu.memory_space<vmem>>, %arg9: memref<32x256xbf16, #tpu.memory_space<vmem>>, %arg10: memref<8x256xbf16, #tpu.memory_space<vmem>>, %arg11: memref<1x256xbf16, #tpu.memory_space<vmem>>, %arg12: memref<256x1024xbf16, #tpu.memory_space<vmem>>, %arg13: memref<1x1024xbf16, #tpu.memory_space<vmem>>, %arg14: memref<2x128xf32, #tpu.memory_space<vmem>>, %arg15: memref<2x1024xbf16, #tpu.memory_space<vmem>>) attributes {dimension_semantics = [#tpu.dimension_semantics<parallel>], iteration_bounds = array<i64: 1>, scalar_prefetch = 0 : i64, scratch_operands = 0 : i64, tpu.core_type = #tpu.core_type<tc>, window_params = [{transform_indices = @transform_0, window_bounds = array<i64: 2, 1024>}, {transform_indices = @transform_1, window_bounds = array<i64: 2, 8>}, {transform_indices = @transform_2, window_bounds = array<i64: 2, 32>}, {pipeline_mode = #tpu.pipeline_mode<synchronous>, transform_indices = @transform_3, window_bounds = array<i64: 1024, 256>}, {pipeline_mode = #tpu.pipeline_mode<synchronous>, transform_indices = @transform_4, window_bounds = array<i64: 8, 256>}, {pipeline_mode = #tpu.pipeline_mode<synchronous>, transform_indices = @transform_5, window_bounds = array<i64: 1, 256>}, {pipeline_mode = #tpu.pipeline_mode<synchronous>, transform_indices = @transform_6, window_bounds = array<i64: 256, 128>}, {pipeline_mode = #tpu.pipeline_mode<synchronous>, transform_indices = @transform_7, window_bounds = array<i64: 1, 128>}, {pipeline_mode = #tpu.pipeline_mode<synchronous>, transform_indices = @transform_8, window_bounds = array<i64: 32, 256>}, {pipeline_mode = #tpu.pipeline_mode<synchronous>, transform_indices = @transform_9, window_bounds = array<i64: 8, 256>}, {pipeline_mode = #tpu.pipeline_mode<synchronous>, transform_indices = @transform_10, window_bounds = array<i64: 1, 256>}, {pipeline_mode = #tpu.pipeline_mode<synchronous>, transform_indices = @transform_11, window_bounds = array<i64: 256, 1024>}, {pipeline_mode = #tpu.pipeline_mode<synchronous>, transform_indices = @transform_12, window_bounds = array<i64: 1, 1024>}, {transform_indices = @transform_13, window_bounds = array<i64: 2, 128>}, {transform_indices = @transform_14, window_bounds = array<i64: 2, 1024>}]} {
    %c0 = arith.constant 0 : index
    %c0_0 = arith.constant 0 : index
    %0 = vector.load %arg2[%c0, %c0_0] : memref<2x8xf32, #tpu.memory_space<vmem>>, vector<2x8xf32>
    %c0_1 = arith.constant 0 : index
    %c0_2 = arith.constant 0 : index
    %1 = vector.load %arg1[%c0_1, %c0_2] : memref<2x1024xf32, #tpu.memory_space<vmem>>, vector<2x1024xf32>
    %2 = arith.truncf %1 : vector<2x1024xf32> to vector<2x1024xbf16>
    %c0_3 = arith.constant 0 : index
    %c0_4 = arith.constant 0 : index
    %3 = vector.load %arg4[%c0_3, %c0_4] : memref<1024x256xbf16, #tpu.memory_space<vmem>>, vector<1024x256xbf16>
    %cst = arith.constant dense<0.000000e+00> : vector<2x256xf32>
    %4 = tpu.matmul %2, %3, %cst {dimension_numbers = #tpu.dot_dimension_numbers<[1], [0], [0], [1], [0, 0, 1, 1], [], []>} : vector<2x1024xbf16>, vector<1024x256xbf16>, vector<2x256xf32> -> vector<2x256xf32>
    %5 = arith.truncf %0 : vector<2x8xf32> to vector<2x8xbf16>
    %c0_5 = arith.constant 0 : index
    %c0_6 = arith.constant 0 : index
    %6 = vector.load %arg5[%c0_5, %c0_6] : memref<8x256xbf16, #tpu.memory_space<vmem>>, vector<8x256xbf16>
    %cst_7 = arith.constant dense<0.000000e+00> : vector<2x256xf32>
    %7 = tpu.matmul %5, %6, %cst_7 {dimension_numbers = #tpu.dot_dimension_numbers<[1], [0], [0], [1], [0, 0, 1, 1], [], []>} : vector<2x8xbf16>, vector<8x256xbf16>, vector<2x256xf32> -> vector<2x256xf32>
    %8 = arith.addf %4, %7 : vector<2x256xf32>
    %c0_8 = arith.constant 0 : index
    %c0_9 = arith.constant 0 : index
    %9 = vector.load %arg6[%c0_8, %c0_9] : memref<1x256xbf16, #tpu.memory_space<vmem>>, vector<1x256xbf16>
    %10 = arith.extf %9 : vector<1x256xbf16> to vector<1x256xf32>
    %11 = vector.broadcast %10 : vector<1x256xf32> to vector<2x256xf32>
    %12 = arith.addf %8, %11 : vector<2x256xf32>
    %cst_10 = arith.constant 0.000000e+00 : f32
    %13 = vector.broadcast %cst_10 : f32 to vector<2x256xf32>
    %14 = arith.maximumf %12, %13 : vector<2x256xf32>
    %15 = arith.truncf %14 : vector<2x256xf32> to vector<2x256xbf16>
    %c0_11 = arith.constant 0 : index
    %c0_12 = arith.constant 0 : index
    %16 = vector.load %arg7[%c0_11, %c0_12] : memref<256x128xbf16, #tpu.memory_space<vmem>>, vector<256x128xbf16>
    %cst_13 = arith.constant dense<0.000000e+00> : vector<2x128xf32>
    %17 = tpu.matmul %15, %16, %cst_13 {dimension_numbers = #tpu.dot_dimension_numbers<[1], [0], [0], [1], [0, 0, 1, 1], [], []>} : vector<2x256xbf16>, vector<256x128xbf16>, vector<2x128xf32> -> vector<2x128xf32>
    %c0_14 = arith.constant 0 : index
    %c0_15 = arith.constant 0 : index
    %18 = vector.load %arg8[%c0_14, %c0_15] : memref<1x128xbf16, #tpu.memory_space<vmem>>, vector<1x128xbf16>
    %19 = arith.extf %18 : vector<1x128xbf16> to vector<1x128xf32>
    %20 = vector.broadcast %19 : vector<1x128xf32> to vector<2x128xf32>
    %21 = arith.addf %17, %20 : vector<2x128xf32>
    %22 = vector.extract_strided_slice %21 {offsets = [0, 0], sizes = [2, 32], strides = [1, 1]} : vector<2x128xf32> to vector<2x32xf32>
    %23 = vector.extract_strided_slice %21 {offsets = [0, 32], sizes = [2, 32], strides = [1, 1]} : vector<2x128xf32> to vector<2x32xf32>
    %cst_16 = arith.constant 5.000000e-01 : f32
    %24 = vector.broadcast %cst_16 : f32 to vector<2x32xf32>
    %25 = arith.mulf %24, %23 : vector<2x32xf32>
    %26 = math.exp %25 : vector<2x32xf32>
    %c0_17 = arith.constant 0 : index
    %c0_18 = arith.constant 0 : index
    %27 = vector.load %arg3[%c0_17, %c0_18] : memref<2x32xf32, #tpu.memory_space<vmem>>, vector<2x32xf32>
    %28 = arith.mulf %26, %27 : vector<2x32xf32>
    %29 = arith.addf %22, %28 : vector<2x32xf32>
    %30 = arith.truncf %29 : vector<2x32xf32> to vector<2x32xbf16>
    %c0_19 = arith.constant 0 : index
    %c0_20 = arith.constant 0 : index
    %31 = vector.load %arg9[%c0_19, %c0_20] : memref<32x256xbf16, #tpu.memory_space<vmem>>, vector<32x256xbf16>
    %cst_21 = arith.constant dense<0.000000e+00> : vector<2x256xf32>
    %32 = tpu.matmul %30, %31, %cst_21 {dimension_numbers = #tpu.dot_dimension_numbers<[1], [0], [0], [1], [0, 0, 1, 1], [], []>} : vector<2x32xbf16>, vector<32x256xbf16>, vector<2x256xf32> -> vector<2x256xf32>
    %33 = arith.truncf %0 : vector<2x8xf32> to vector<2x8xbf16>
    %c0_22 = arith.constant 0 : index
    %c0_23 = arith.constant 0 : index
    %34 = vector.load %arg10[%c0_22, %c0_23] : memref<8x256xbf16, #tpu.memory_space<vmem>>, vector<8x256xbf16>
    %cst_24 = arith.constant dense<0.000000e+00> : vector<2x256xf32>
    %35 = tpu.matmul %33, %34, %cst_24 {dimension_numbers = #tpu.dot_dimension_numbers<[1], [0], [0], [1], [0, 0, 1, 1], [], []>} : vector<2x8xbf16>, vector<8x256xbf16>, vector<2x256xf32> -> vector<2x256xf32>
    %36 = arith.addf %32, %35 : vector<2x256xf32>
    %c0_25 = arith.constant 0 : index
    %c0_26 = arith.constant 0 : index
    %37 = vector.load %arg11[%c0_25, %c0_26] : memref<1x256xbf16, #tpu.memory_space<vmem>>, vector<1x256xbf16>
    %38 = arith.extf %37 : vector<1x256xbf16> to vector<1x256xf32>
    %39 = vector.broadcast %38 : vector<1x256xf32> to vector<2x256xf32>
    %40 = arith.addf %36, %39 : vector<2x256xf32>
    %cst_27 = arith.constant 0.000000e+00 : f32
    %41 = vector.broadcast %cst_27 : f32 to vector<2x256xf32>
    %42 = arith.maximumf %40, %41 : vector<2x256xf32>
    %43 = arith.truncf %42 : vector<2x256xf32> to vector<2x256xbf16>
    %c0_28 = arith.constant 0 : index
    %c0_29 = arith.constant 0 : index
    %44 = vector.load %arg12[%c0_28, %c0_29] : memref<256x1024xbf16, #tpu.memory_space<vmem>>, vector<256x1024xbf16>
    %cst_30 = arith.constant dense<0.000000e+00> : vector<2x1024xf32>
    %45 = tpu.matmul %43, %44, %cst_30 {dimension_numbers = #tpu.dot_dimension_numbers<[1], [0], [0], [1], [0, 0, 1, 1], [], []>} : vector<2x256xbf16>, vector<256x1024xbf16>, vector<2x1024xf32> -> vector<2x1024xf32>
    %c0_31 = arith.constant 0 : index
    %c0_32 = arith.constant 0 : index
    %46 = vector.load %arg13[%c0_31, %c0_32] : memref<1x1024xbf16, #tpu.memory_space<vmem>>, vector<1x1024xbf16>
    %47 = arith.extf %46 : vector<1x1024xbf16> to vector<1x1024xf32>
    %48 = vector.broadcast %47 : vector<1x1024xf32> to vector<2x1024xf32>
    %49 = arith.addf %45, %48 : vector<2x1024xf32>
    %c0_33 = arith.constant 0 : index
    %c0_34 = arith.constant 0 : index
    %50 = vector.load %arg14[%c0_33, %c0_34] : memref<2x128xf32, #tpu.memory_space<vmem>>, vector<2x128xf32>
    tpu.vector_store %arg14[%c0_33, %c0_34], %21 {strides = array<i32>} : memref<2x128xf32, #tpu.memory_space<vmem>>, vector<2x128xf32>,
    %c0_35 = arith.constant 0 : index
    %c64 = arith.constant 64 : index
    %51 = vector.load %arg14[%c0_35, %c64] : memref<2x128xf32, #tpu.memory_space<vmem>>, vector<2x32xf32>
    tpu.vector_store %arg14[%c0_35, %c64], %29 {strides = array<i32>} : memref<2x128xf32, #tpu.memory_space<vmem>>, vector<2x32xf32>,
    %52 = arith.negf %49 : vector<2x1024xf32>
    %53 = math.exp %52 : vector<2x1024xf32>
    %cst_36 = arith.constant 1.000000e+00 : f32
    %54 = vector.broadcast %cst_36 : f32 to vector<2x1024xf32>
    %55 = arith.addf %54, %53 : vector<2x1024xf32>
    %56 = arith.divf %54, %55 : vector<2x1024xf32>
    %57 = arith.truncf %56 : vector<2x1024xf32> to vector<2x1024xbf16>
    %c0_37 = arith.constant 0 : index
    %c0_38 = arith.constant 0 : index
    %58 = vector.load %arg15[%c0_37, %c0_38] : memref<2x1024xbf16, #tpu.memory_space<vmem>>, vector<2x1024xbf16>
    tpu.vector_store %arg15[%c0_37, %c0_38], %57 {strides = array<i32>} : memref<2x1024xbf16, #tpu.memory_space<vmem>>, vector<2x1024xbf16>,
    return
  }
  func.func @transform_0(%arg0: i32) -> (i32, i32) {
    %c0_i32 = arith.constant 0 : i32
    %c0_i32_0 = arith.constant 0 : i32
    return %arg0, %c0_i32 : i32, i32
  }
  func.func @transform_1(%arg0: i32) -> (i32, i32) {
    %c0_i32 = arith.constant 0 : i32
    %c0_i32_0 = arith.constant 0 : i32
    return %arg0, %c0_i32 : i32, i32
  }
  func.func @transform_2(%arg0: i32) -> (i32, i32) {
    %c0_i32 = arith.constant 0 : i32
    %c0_i32_0 = arith.constant 0 : i32
    return %arg0, %c0_i32 : i32, i32
  }
  func.func @transform_3(%arg0: i32) -> (i32, i32) {
    %c0_i32 = arith.constant 0 : i32
    %c0_i32_0 = arith.constant 0 : i32
    %c0_i32_1 = arith.constant 0 : i32
    return %c0_i32, %c0_i32_0 : i32, i32
  }
  func.func @transform_4(%arg0: i32) -> (i32, i32) {
    %c0_i32 = arith.constant 0 : i32
    %c0_i32_0 = arith.constant 0 : i32
    %c0_i32_1 = arith.constant 0 : i32
    return %c0_i32, %c0_i32_0 : i32, i32
  }
  func.func @transform_5(%arg0: i32) -> (i32, i32) {
    %c0_i32 = arith.constant 0 : i32
    %c0_i32_0 = arith.constant 0 : i32
    %c0_i32_1 = arith.constant 0 : i32
    return %c0_i32, %c0_i32_0 : i32, i32
  }
  func.func @transform_6(%arg0: i32) -> (i32, i32) {
    %c0_i32 = arith.constant 0 : i32
    %c0_i32_0 = arith.constant 0 : i32
    %c0_i32_1 = arith.constant 0 : i32
    return %c0_i32, %c0_i32_0 : i32, i32
  }
  func.func @transform_7(%arg0: i32) -> (i32, i32) {
    %c0_i32 = arith.constant 0 : i32
    %c0_i32_0 = arith.constant 0 : i32
    %c0_i32_1 = arith.constant 0 : i32
    return %c0_i32, %c0_i32_0 : i32, i32
  }
  func.func @transform_8(%arg0: i32) -> (i32, i32) {
    %c0_i32 = arith.constant 0 : i32
    %c0_i32_0 = arith.constant 0 : i32
    %c0_i32_1 = arith.constant 0 : i32
    return %c0_i32, %c0_i32_0 : i32, i32
  }
  func.func @transform_9(%arg0: i32) -> (i32, i32) {
    %c0_i32 = arith.constant 0 : i32
    %c0_i32_0 = arith.constant 0 : i32
    %c0_i32_1 = arith.constant 0 : i32
    return %c0_i32, %c0_i32_0 : i32, i32
  }
  func.func @transform_10(%arg0: i32) -> (i32, i32) {
    %c0_i32 = arith.constant 0 : i32
    %c0_i32_0 = arith.constant 0 : i32
    %c0_i32_1 = arith.constant 0 : i32
    return %c0_i32, %c0_i32_0 : i32, i32
  }
  func.func @transform_11(%arg0: i32) -> (i32, i32) {
    %c0_i32 = arith.constant 0 : i32
    %c0_i32_0 = arith.constant 0 : i32
    %c0_i32_1 = arith.constant 0 : i32
    return %c0_i32, %c0_i32_0 : i32, i32
  }
  func.func @transform_12(%arg0: i32) -> (i32, i32) {
    %c0_i32 = arith.constant 0 : i32
    %c0_i32_0 = arith.constant 0 : i32
    %c0_i32_1 = arith.constant 0 : i32
    return %c0_i32, %c0_i32_0 : i32, i32
  }
  func.func @transform_13(%arg0: i32) -> (i32, i32) {
    %c0_i32 = arith.constant 0 : i32
    %c0_i32_0 = arith.constant 0 : i32
    return %arg0, %c0_i32 : i32, i32
  }
  func.func @transform_14(%arg0: i32) -> (i32, i32) {
    %c0_i32 = arith.constant 0 : i32
    %c0_i32_0 = arith.constant 0 : i32
    return %arg0, %c0_i32 : i32, i32
  }
}

</mosaic_0001>

<llo_original>
// kernel: vae_inv_forward.1
$region0: #{vae_inv_forward.1}
  #allocation0 [shape = 'u32[]', space=smem, size = 0x4, offset = 0x4, fixed_abs, tag = 'smem constant byte address 0x4 - core index']
  #allocation1 [shape = 'u32[72,128]{1,0:T(1,128)}', space=vmem, size = 0x9000, scoped, tag = 'internal scratch']
  %s0 = inlined_call_operand.vmem [shape: f32[2,1024], index: 0, kind: input, shape index: {}]
  %s1 = inlined_call_operand.vmem [shape: f32[2,8], index: 1, kind: input, shape index: {}]
  %s2 = inlined_call_operand.vmem [shape: f32[2,32], index: 2, kind: input, shape index: {}]
  %s3 = inlined_call_operand.hbm [shape: bf16[1024,256], index: 3, kind: input, shape index: {}]
  %s4 = inlined_call_operand.vmem [shape: bf16[8,256], index: 4, kind: input, shape index: {}]
  %s5 = inlined_call_operand.hbm [shape: bf16[1,256], index: 5, kind: input, shape index: {}]
  %s6 = inlined_call_operand.vmem [shape: bf16[256,128], index: 6, kind: input, shape index: {}]
  %s7 = inlined_call_operand.vmem [shape: bf16[1,128], index: 7, kind: input, shape index: {}]
  %s8 = inlined_call_operand.hbm [shape: bf16[32,256], index: 8, kind: input, shape index: {}]
  %s9 = inlined_call_operand.vmem [shape: bf16[8,256], index: 9, kind: input, shape index: {}]
  %s10 = inlined_call_operand.hbm [shape: bf16[1,256], index: 10, kind: input, shape index: {}]
  %s11 = inlined_call_operand.hbm [shape: bf16[256,1024], index: 11, kind: input, shape index: {}]
  %s12 = inlined_call_operand.hbm [shape: bf16[1,1024], index: 12, kind: input, shape index: {}]
  %s13 = inlined_call_operand.vmem [shape: f32[2,128], index: 13, kind: output, shape index: {0}]
  %s14 = inlined_call_operand.hbm [shape: bf16[2,1024], index: 14, kind: output, shape index: {1}]
  %15 = xla_tuple %s13, %s14
  %s16 = sld [smem:[#allocation0]]
  $region94: #{vae_inv_forward.1} parent=0
    _
  %s18 = ssub.s32 1, %s16
  %s19 = scalar_select 0, %s18, %s16
  $region1: #{vae_inv_forward.1} parent=0
    #allocation2 [shape = 'u8[524288]{0}', space=vmem, size = 0x80000, scoped, tag = 'input window, operand 3, single buffered']
    #allocation3 [shape = 's32[1]{0}', space=sflag, size = 0x4, scoped, tag = 'scoped memory for vae_inv_forward.1']
    #allocation4 [shape = 's32[1]{0}', space=sflag, size = 0x4, scoped, tag = 'scoped memory for vae_inv_forward.1']
    #allocation5 [shape = 'u8[1024]{0}', space=vmem, size = 0x400, scoped, tag = 'input window, operand 5, single buffered']
    #allocation6 [shape = 's32[1]{0}', space=sflag, size = 0x4, scoped, tag = 'scoped memory for vae_inv_forward.1']
    #allocation7 [shape = 'u8[16384]{0}', space=vmem, size = 0x4000, scoped, tag = 'input window, operand 8, single buffered']
    #allocation8 [shape = 'u8[1024]{0}', space=vmem, size = 0x400, scoped, tag = 'input window, operand 10, single buffered']
    #allocation9 [shape = 's32[1]{0}', space=sflag, size = 0x4, scoped, tag = 'scoped memory for vae_inv_forward.1']
    #allocation10 [shape = 'u8[524288]{0}', space=vmem, size = 0x80000, scoped, tag = 'input window, operand 11, single buffered']
    #allocation11 [shape = 'u8[4096]{0}', space=vmem, size = 0x1000, scoped, tag = 'input window, operand 12, single buffered']
    #allocation12 [shape = 's32[1]{0}', space=sflag, size = 0x4, scoped, tag = 'scoped memory for vae_inv_forward.1']
    #allocation13 [shape = 'u8[4096]{0}', space=vmem, size = 0x1000, scoped, tag = 'output window, operand 1, single buffered']
    %20 = vsyncpa [#allocation3], 0
    %21 = vsyncpa [#allocation6], 0
    %22 = vsyncpa [#allocation9], 0
    %23 = vsyncpa [#allocation12], 0
    %24 = vsyncpa [#allocation4], 0
    // Predicated region
    $region2: #{vae_inv_forward.1} parent=1 // pred_check
      _
    $region3: #{vae_inv_forward.1} parent=1 // pred_check_branch
      %26 = sbr.rel (0) target = $region5
    $region4: #{vae_inv_forward.1} parent=1 // pred_region
      _
    $region5: #{vae_inv_forward.1} parent=1 // pred_fallthru
      _
    // Predicated region
    $region6: #{vae_inv_forward.1} parent=1 // pred_check
      _
    $region7: #{vae_inv_forward.1} parent=1 // pred_check_branch
      %28 = sbr.rel (0) target = $region9
    $region8: #{vae_inv_forward.1} parent=1 // pred_region
      _
    $region9: #{vae_inv_forward.1} parent=1 // pred_fallthru
      _
    // Predicated region
    $region10: #{vae_inv_forward.1} parent=1 // pred_check
      _
    $region11: #{vae_inv_forward.1} parent=1 // pred_check_branch
      %30 = sbr.rel (0) target = $region13
    $region12: #{vae_inv_forward.1} parent=1 // pred_region
      _
    $region13: #{vae_inv_forward.1} parent=1 // pred_fallthru
      _
    // Predicated region
    $region14: #{vae_inv_forward.1} parent=1 // pred_check
      _
    $region15: #{vae_inv_forward.1} parent=1 // pred_check_branch
      %32 = sbr.rel (0) target = $region17
    $region16: #{vae_inv_forward.1} parent=1 // pred_region
      %34 = vsyncadd [#allocation3], 0
      %s35 = sshll.u32 %s3, 4
      %s36 = int_to_ptr.hbm [resolvable:$true] %s35
      %s37 = sshll.u32 [#allocation2], 4
      %s38 = int_to_ptr.vmem [resolvable:$true] %s37
      %43 = dma.hbm_to_vmem [thread:$0]  %s36, 16384, %s38, [#allocation3], 128, 128, 8
    $region17: #{vae_inv_forward.1} parent=1 // pred_fallthru
      _
    // Predicated region
    $region18: #{vae_inv_forward.1} parent=1 // pred_check
      _
    $region19: #{vae_inv_forward.1} parent=1 // pred_check_branch
      %45 = sbr.rel (0) target = $region21
    $region20: #{vae_inv_forward.1} parent=1 // pred_region
      _
    $region21: #{vae_inv_forward.1} parent=1 // pred_fallthru
      _
    // Predicated region
    $region22: #{vae_inv_forward.1} parent=1 // pred_check
      _
    $region23: #{vae_inv_forward.1} parent=1 // pred_check_branch
      %47 = sbr.rel (0) target = $region25
    $region24: #{vae_inv_forward.1} parent=1 // pred_region
      %49 = vsyncadd [#allocation6], 0
      %s51 = sshll.u32 %s5, 4
      %s52 = int_to_ptr.hbm [resolvable:$true] %s51
      %s53 = sshll.u32 [#allocation5], 4
      %s54 = int_to_ptr.vmem [resolvable:$true] %s53
      %56 = dma.hbm_to_vmem [thread:$0]  %s52, 32, %s54, [#allocation6]
    $region25: #{vae_inv_forward.1} parent=1 // pred_fallthru
      _
    // Predicated region
    $region26: #{vae_inv_forward.1} parent=1 // pred_check
      _
    $region27: #{vae_inv_forward.1} parent=1 // pred_check_branch
      %58 = sbr.rel (0) target = $region29
    $region28: #{vae_inv_forward.1} parent=1 // pred_region
      _
    $region29: #{vae_inv_forward.1} parent=1 // pred_fallthru
      _
    // Predicated region
    $region30: #{vae_inv_forward.1} parent=1 // pred_check
      _
    $region31: #{vae_inv_forward.1} parent=1 // pred_check_branch
      %60 = sbr.rel (0) target = $region33
    $region32: #{vae_inv_forward.1} parent=1 // pred_region
      _
    $region33: #{vae_inv_forward.1} parent=1 // pred_fallthru
      _
    // Predicated region
    $region34: #{vae_inv_forward.1} parent=1 // pred_check
      _
    $region35: #{vae_inv_forward.1} parent=1 // pred_check_branch
      %62 = sbr.rel (0) target = $region37
    $region36: #{vae_inv_forward.1} parent=1 // pred_region
      %64 = vsyncadd [#allocation6], 0
      %s65 = sshll.u32 %s8, 4
      %s66 = int_to_ptr.hbm [resolvable:$true] %s65
      %s67 = sshll.u32 [#allocation7], 4
      %s68 = int_to_ptr.vmem [resolvable:$true] %s67
      %73 = dma.hbm_to_vmem [thread:$0]  %s66, 512, %s68, [#allocation6], 128, 128, 8
    $region37: #{vae_inv_forward.1} parent=1 // pred_fallthru
      _
    // Predicated region
    $region38: #{vae_inv_forward.1} parent=1 // pred_check
      _
    $region39: #{vae_inv_forward.1} parent=1 // pred_check_branch
      %75 = sbr.rel (0) target = $region41
    $region40: #{vae_inv_forward.1} parent=1 // pred_region
      _
    $region41: #{vae_inv_forward.1} parent=1 // pred_fallthru
      _
    // Predicated region
    $region42: #{vae_inv_forward.1} parent=1 // pred_check
      _
    $region43: #{vae_inv_forward.1} parent=1 // pred_check_branch
      %77 = sbr.rel (0) target = $region45
    $region44: #{vae_inv_forward.1} parent=1 // pred_region
      %79 = vsyncadd [#allocation9], 0
      %s81 = sshll.u32 %s10, 4
      %s82 = int_to_ptr.hbm [resolvable:$true] %s81
      %s83 = sshll.u32 [#allocation8], 4
      %s84 = int_to_ptr.vmem [resolvable:$true] %s83
      %86 = dma.hbm_to_vmem [thread:$0]  %s82, 32, %s84, [#allocation9]
    $region45: #{vae_inv_forward.1} parent=1 // pred_fallthru
      _
    // Predicated region
    $region46: #{vae_inv_forward.1} parent=1 // pred_check
      _
    $region47: #{vae_inv_forward.1} parent=1 // pred_check_branch
      %88 = sbr.rel (0) target = $region49
    $region48: #{vae_inv_forward.1} parent=1 // pred_region
      %90 = vsyncadd [#allocation9], 0
      %s91 = sshll.u32 %s11, 4
      %s92 = int_to_ptr.hbm [resolvable:$true] %s91
      %s93 = sshll.u32 [#allocation10], 4
      %s94 = int_to_ptr.vmem [resolvable:$true] %s93
      %99 = dma.hbm_to_vmem [thread:$0]  %s92, 16384, %s94, [#allocation9], 512, 512, 32
    $region49: #{vae_inv_forward.1} parent=1 // pred_fallthru
      _
    // Predicated region
    $region50: #{vae_inv_forward.1} parent=1 // pred_check
      _
    $region51: #{vae_inv_forward.1} parent=1 // pred_check_branch
      %101 = sbr.rel (0) target = $region53
    $region52: #{vae_inv_forward.1} parent=1 // pred_region
      %103 = vsyncadd [#allocation12], 0
      %s105 = sshll.u32 %s12, 4
      %s106 = int_to_ptr.hbm [resolvable:$true] %s105
      %s107 = sshll.u32 [#allocation11], 4
      %s108 = int_to_ptr.vmem [resolvable:$true] %s107
      %110 = dma.hbm_to_vmem [thread:$0]  %s106, 128, %s108, [#allocation12]
    $region53: #{vae_inv_forward.1} parent=1 // pred_fallthru
      _
    // Predicated region
    $region54: #{vae_inv_forward.1} parent=1 // pred_check
      _
    $region55: #{vae_inv_forward.1} parent=1 // pred_check_branch
      %112 = sbr.rel (0) target = $region57
    $region56: #{vae_inv_forward.1} parent=1 // pred_region
      %114 = dma.done [#allocation3], 16384
    $region57: #{vae_inv_forward.1} parent=1 // pred_fallthru
      _
    // Predicated region
    $region58: #{vae_inv_forward.1} parent=1 // pred_check
      _
    $region59: #{vae_inv_forward.1} parent=1 // pred_check_branch
      %116 = sbr.rel (0) target = $region61
    $region60: #{vae_inv_forward.1} parent=1 // pred_region
      %118 = dma.done [#allocation6], 32
    $region61: #{vae_inv_forward.1} parent=1 // pred_fallthru
      _
    // Predicated region
    $region62: #{vae_inv_forward.1} parent=1 // pred_check
      _
    $region63: #{vae_inv_forward.1} parent=1 // pred_check_branch
      %120 = sbr.rel (0) target = $region65
    $region64: #{vae_inv_forward.1} parent=1 // pred_region
      %122 = dma.done [#allocation6], 512
    $region65: #{vae_inv_forward.1} parent=1 // pred_fallthru
      _
    // Predicated region
    $region66: #{vae_inv_forward.1} parent=1 // pred_check
      _
    $region67: #{vae_inv_forward.1} parent=1 // pred_check_branch
      %124 = sbr.rel (0) target = $region69
    $region68: #{vae_inv_forward.1} parent=1 // pred_region
      %126 = dma.done [#allocation9], 32
    $region69: #{vae_inv_forward.1} parent=1 // pred_fallthru
      _
    // Predicated region
    $region70: #{vae_inv_forward.1} parent=1 // pred_check
      _
    $region71: #{vae_inv_forward.1} parent=1 // pred_check_branch
      %128 = sbr.rel (0) target = $region73
    $region72: #{vae_inv_forward.1} parent=1 // pred_region
      %130 = dma.done [#allocation9], 16384
    $region73: #{vae_inv_forward.1} parent=1 // pred_fallthru
      _
    // Predicated region
    $region74: #{vae_inv_forward.1} parent=1 // pred_check
      _
    $region75: #{vae_inv_forward.1} parent=1 // pred_check_branch
      %132 = sbr.rel (0) target = $region77
    $region76: #{vae_inv_forward.1} parent=1 // pred_region
      %134 = dma.done [#allocation12], 128
    $region77: #{vae_inv_forward.1} parent=1 // pred_fallthru
      _
    %v136 = vld [vmem:[%s1] sm:$0x3]
    %v137 = vld [vmem:[%s0] sm:$0xff]
    %v138 = vld [vmem:[%s0 + $0x8] sm:$0xff]
    %141 = vst [vmem:[#allocation1] ss:$4 sm:$0xff] %v137
    %s142 = scalar_lea.vmem [#allocation1], 32
    %143 = vst [vmem:[%s142] ss:$4 sm:$0xff] %v138
    %v144 = vld.sshfl [vmem:[#allocation1] sm:$0xff pattern:$0x73625140]
    %v145 = vld.sshfl [vmem:[#allocation1 + $0x8] sm:$0xff pattern:$0x73625140]
    %v146 = vld.sshfl [vmem:[#allocation1 + $0x10] sm:$0xff pattern:$0x73625140]
    %v147 = vld.sshfl [vmem:[#allocation1 + $0x18] sm:$0xff pattern:$0x73625140]
    %v148 = vld.sshfl [vmem:[#allocation1 + $0x20] sm:$0xff pattern:$0x73625140]
    %v149 = vld.sshfl [vmem:[#allocation1 + $0x28] sm:$0xff pattern:$0x73625140]
    %v150 = vld.sshfl [vmem:[#allocation1 + $0x30] sm:$0xff pattern:$0x73625140]
    %v151 = vld.sshfl [vmem:[#allocation1 + $0x38] sm:$0xff pattern:$0x73625140]
    %v160 = vpack.c.bf16 %v144, %v144
    %v161 = vpack.c.bf16 %v145, %v145
    %v162 = vpack.c.bf16 %v146, %v146
    %v163 = vpack.c.bf16 %v147, %v147
    %v164 = vpack.c.bf16 %v148, %v148
    %v165 = vpack.c.bf16 %v149, %v149
    %v166 = vpack.c.bf16 %v150, %v150
    %v167 = vpack.c.bf16 %v151, %v151
    %v168 = vld [vmem:[#allocation2] sm:$0xff]
    %v169 = vld [vmem:[#allocation2 + $0x8] sm:$0xff]
    %v170 = vld [vmem:[#allocation2 + $0x10] sm:$0xff]
    %v171 = vld [vmem:[#allocation2 + $0x18] sm:$0xff]
    %v172 = vld [vmem:[#allocation2 + $0x20] sm:$0xff]
    %v173 = vld [vmem:[#allocation2 + $0x28] sm:$0xff]
    %v174 = vld [vmem:[#allocation2 + $0x30] sm:$0xff]
    %v175 = vld [vmem:[#allocation2 + $0x38] sm:$0xff]
    %v176 = vld [vmem:[#allocation2 + $0x40] sm:$0xff]
    %v177 = vld [vmem:[#allocation2 + $0x48] sm:$0xff]
    %v178 = vld [vmem:[#allocation2 + $0x50] sm:$0xff]
    %v179 = vld [vmem:[#allocation2 + $0x58] sm:$0xff]
    %v180 = vld [vmem:[#allocation2 + $0x60] sm:$0xff]
    %v181 = vld [vmem:[#allocation2 + $0x68] sm:$0xff]
    %v182 = vld [vmem:[#allocation2 + $0x70] sm:$0xff]
    %v183 = vld [vmem:[#allocation2 + $0x78] sm:$0xff]
    %v184 = vld [vmem:[#allocation2 + $0x80] sm:$0xff]
    %v185 = vld [vmem:[#allocation2 + $0x88] sm:$0xff]
    %v186 = vld [vmem:[#allocation2 + $0x90] sm:$0xff]
    %v187 = vld [vmem:[#allocation2 + $0x98] sm:$0xff]
    %v188 = vld [vmem:[#allocation2 + $0xa0] sm:$0xff]
    %v189 = vld [vmem:[#allocation2 + $0xa8] sm:$0xff]
    %v190 = vld [vmem:[#allocation2 + $0xb0] sm:$0xff]
    %v191 = vld [vmem:[#allocation2 + $0xb8] sm:$0xff]
    %v192 = vld [vmem:[#allocation2 + $0xc0] sm:$0xff]
    %v193 = vld [vmem:[#allocation2 + $0xc8] sm:$0xff]
    %v194 = vld [vmem:[#allocation2 + $0xd0] sm:$0xff]
    %v195 = vld [vmem:[#allocation2 + $0xd8] sm:$0xff]
    %v196 = vld [vmem:[#allocation2 + $0xe0] sm:$0xff]
    %v197 = vld [vmem:[#allocation2 + $0xe8] sm:$0xff]
    %v198 = vld [vmem:[#allocation2 + $0xf0] sm:$0xff]
    %v199 = vld [vmem:[#allocation2 + $0xf8] sm:$0xff]
    %v200 = vld [vmem:[#allocation2 + $0x100] sm:$0xff]
    %v201 = vld [vmem:[#allocation2 + $0x108] sm:$0xff]
    %v202 = vld [vmem:[#allocation2 + $0x110] sm:$0xff]
    %v203 = vld [vmem:[#allocation2 + $0x118] sm:$0xff]
    %v204 = vld [vmem:[#allocation2 + $0x120] sm:$0xff]
    %v205 = vld [vmem:[#allocation2 + $0x128] sm:$0xff]
    %v206 = vld [vmem:[#allocation2 + $0x130] sm:$0xff]
    %v207 = vld [vmem:[#allocation2 + $0x138] sm:$0xff]
    %v208 = vld [vmem:[#allocation2 + $0x140] sm:$0xff]
    %v209 = vld [vmem:[#allocation2 + $0x148] sm:$0xff]
    %v210 = vld [vmem:[#allocation2 + $0x150] sm:$0xff]
    %v211 = vld [vmem:[#allocation2 + $0x158] sm:$0xff]
    %v212 = vld [vmem:[#allocation2 + $0x160] sm:$0xff]
    %v213 = vld [vmem:[#allocation2 + $0x168] sm:$0xff]
    %v214 = vld [vmem:[#allocation2 + $0x170] sm:$0xff]
    %v215 = vld [vmem:[#allocation2 + $0x178] sm:$0xff]
    %v216 = vld [vmem:[#allocation2 + $0x180] sm:$0xff]
    %v217 = vld [vmem:[#allocation2 + $0x188] sm:$0xff]
    %v218 = vld [vmem:[#allocation2 + $0x190] sm:$0xff]
    %v219 = vld [vmem:[#allocation2 + $0x198] sm:$0xff]
    %v220 = vld [vmem:[#allocation2 + $0x1a0] sm:$0xff]
    %v221 = vld [vmem:[#allocation2 + $0x1a8] sm:$0xff]
    %v222 = vld [vmem:[#allocation2 + $0x1b0] sm:$0xff]
    %v223 = vld [vmem:[#allocation2 + $0x1b8] sm:$0xff]
    %v224 = vld [vmem:[#allocation2 + $0x1c0] sm:$0xff]
    %v225 = vld [vmem:[#allocation2 + $0x1c8] sm:$0xff]
    %v226 = vld [vmem:[#allocation2 + $0x1d0] sm:$0xff]
    %v227 = vld [vmem:[#allocation2 + $0x1d8] sm:$0xff]
    %v228 = vld [vmem:[#allocation2 + $0x1e0] sm:$0xff]
    %v229 = vld [vmem:[#allocation2 + $0x1e8] sm:$0xff]
    %v230 = vld [vmem:[#allocation2 + $0x1f0] sm:$0xff]
    %v231 = vld [vmem:[#allocation2 + $0x1f8] sm:$0xff]
    %v232 = vld [vmem:[#allocation2 + $0x200] sm:$0xff]
    %v233 = vld [vmem:[#allocation2 + $0x208] sm:$0xff]
    %v234 = vld [vmem:[#allocation2 + $0x210] sm:$0xff]
    %v235 = vld [vmem:[#allocation2 + $0x218] sm:$0xff]
    %v236 = vld [vmem:[#allocation2 + $0x220] sm:$0xff]
    %v237 = vld [vmem:[#allocation2 + $0x228] sm:$0xff]
    %v238 = vld [vmem:[#allocation2 + $0x230] sm:$0xff]
    %v239 = vld [vmem:[#allocation2 + $0x238] sm:$0xff]
    %v240 = vld [vmem:[#allocation2 + $0x240] sm:$0xff]
    %v241 = vld [vmem:[#allocation2 + $0x248] sm:$0xff]
    %v242 = vld [vmem:[#allocation2 + $0x250] sm:$0xff]
    %v243 = vld [vmem:[#allocation2 + $0x258] sm:$0xff]
    %v244 = vld [vmem:[#allocation2 + $0x260] sm:$0xff]
    %v245 = vld [vmem:[#allocation2 + $0x268] sm:$0xff]
    %v246 = vld [vmem:[#allocation2 + $0x270] sm:$0xff]
    %v247 = vld [vmem:[#allocation2 + $0x278] sm:$0xff]
    %v248 = vld [vmem:[#allocation2 + $0x280] sm:$0xff]
    %v249 = vld [vmem:[#allocation2 + $0x288] sm:$0xff]
    %v250 = vld [vmem:[#allocation2 + $0x290] sm:$0xff]
    %v251 = vld [vmem:[#allocation2 + $0x298] sm:$0xff]
    %v252 = vld [vmem:[#allocation2 + $0x2a0] sm:$0xff]
    %v253 = vld [vmem:[#allocation2 + $0x2a8] sm:$0xff]
    %v254 = vld [vmem:[#allocation2 + $0x2b0] sm:$0xff]
    %v255 = vld [vmem:[#allocation2 + $0x2b8] sm:$0xff]
    %v256 = vld [vmem:[#allocation2 + $0x2c0] sm:$0xff]
    %v257 = vld [vmem:[#allocation2 + $0x2c8] sm:$0xff]
    %v258 = vld [vmem:[#allocation2 + $0x2d0] sm:$0xff]
    %v259 = vld [vmem:[#allocation2 + $0x2d8] sm:$0xff]
    %v260 = vld [vmem:[#allocation2 + $0x2e0] sm:$0xff]
    %v261 = vld [vmem:[#allocation2 + $0x2e8] sm:$0xff]
    %v262 = vld [vmem:[#allocation2 + $0x2f0] sm:$0xff]
    %v263 = vld [vmem:[#allocation2 + $0x2f8] sm:$0xff]
    %v264 = vld [vmem:[#allocation2 + $0x300] sm:$0xff]
    %v265 = vld [vmem:[#allocation2 + $0x308] sm:$0xff]
    %v266 = vld [vmem:[#allocation2 + $0x310] sm:$0xff]
    %v267 = vld [vmem:[#allocation2 + $0x318] sm:$0xff]
    %v268 = vld [vmem:[#allocation2 + $0x320] sm:$0xff]
    %v269 = vld [vmem:[#allocation2 + $0x328] sm:$0xff]
    %v270 = vld [vmem:[#allocation2 + $0x330] sm:$0xff]
    %v271 = vld [vmem:[#allocation2 + $0x338] sm:$0xff]
    %v272 = vld [vmem:[#allocation2 + $0x340] sm:$0xff]
    %v273 = vld [vmem:[#allocation2 + $0x348] sm:$0xff]
    %v274 = vld [vmem:[#allocation2 + $0x350] sm:$0xff]
    %v275 = vld [vmem:[#allocation2 + $0x358] sm:$0xff]
    %v276 = vld [vmem:[#allocation2 + $0x360] sm:$0xff]
    %v277 = vld [vmem:[#allocation2 + $0x368] sm:$0xff]
    %v278 = vld [vmem:[#allocation2 + $0x370] sm:$0xff]
    %v279 = vld [vmem:[#allocation2 + $0x378] sm:$0xff]
    %v280 = vld [vmem:[#allocation2 + $0x380] sm:$0xff]
    %v281 = vld [vmem:[#allocation2 + $0x388] sm:$0xff]
    %v282 = vld [vmem:[#allocation2 + $0x390] sm:$0xff]
    %v283 = vld [vmem:[#allocation2 + $0x398] sm:$0xff]
    %v284 = vld [vmem:[#allocation2 + $0x3a0] sm:$0xff]
    %v285 = vld [vmem:[#allocation2 + $0x3a8] sm:$0xff]
    %v286 = vld [vmem:[#allocation2 + $0x3b0] sm:$0xff]
    %v287 = vld [vmem:[#allocation2 + $0x3b8] sm:$0xff]
    %v288 = vld [vmem:[#allocation2 + $0x3c0] sm:$0xff]
    %v289 = vld [vmem:[#allocation2 + $0x3c8] sm:$0xff]
    %v290 = vld [vmem:[#allocation2 + $0x3d0] sm:$0xff]
    %v291 = vld [vmem:[#allocation2 + $0x3d8] sm:$0xff]
    %v292 = vld [vmem:[#allocation2 + $0x3e0] sm:$0xff]
    %v293 = vld [vmem:[#allocation2 + $0x3e8] sm:$0xff]
    %v294 = vld [vmem:[#allocation2 + $0x3f0] sm:$0xff]
    %v295 = vld [vmem:[#allocation2 + $0x3f8] sm:$0xff]
    %v296 = vpack.c.bf16 %v136, %v136
    %v297 = vld [vmem:[%s4] sm:$0xff]
    %v299 = vunpack.c.l.b16 %v297
    %v300 = vunpack.c.h.b16 %v297
    %v301 = vpack.c.b16 %v299, %v299
    %v302 = vpack.c.b16 %v300, %v300
    %vm303 = vcmask 64512
    %v305 = vsel %vm303, %v296, 0
    %vm307 = vcmask 1043456
    %v309 = vsel %vm307, %v301, 0
    %v312 = vsel %vm307, %v302, 0
    %314 = vmatpush.bf16.msra.mxu0 0
    %315 = vmatpush.bf16.msra.mxu0 0
    %316 = vmatpush.bf16.msra.mxu0 0
    %317 = vmatpush.bf16.msra.mxu0 0
    %318 = vmatpush.bf16.msra.mxu0 0
    %319 = vmatpush.bf16.msra.mxu0 0
    %320 = vmatpush.bf16.msra.mxu0 0
    %321 = vmatpush.bf16.msra.mxu0 %v309
    %322 = vmatmul.bf16.gmra.mxu0 %v305
    %v323 = vpop.f32.mrf.mxu0
    %v324 = vadd.f32 0.0, %v323
    %v325 = vpop.f32.mrf.mxu0
    %326 = vdwg.mxu0
    %327 = vmatpush.bf16.msra.mxu0 0
    %328 = vmatpush.bf16.msra.mxu0 0
    %329 = vmatpush.bf16.msra.mxu0 0
    %330 = vmatpush.bf16.msra.mxu0 0
    %331 = vmatpush.bf16.msra.mxu0 0
    %332 = vmatpush.bf16.msra.mxu0 0
    %333 = vmatpush.bf16.msra.mxu0 0
    %334 = vmatpush.bf16.msra.mxu0 %v312
    %335 = vmatmul.bf16.gmra.mxu0 %v305
    %v336 = vpop.f32.mrf.mxu0
    %v337 = vadd.f32 0.0, %v336
    %v338 = vpop.f32.mrf.mxu0
    %339 = vdwg.mxu0
    %v468 = vunpack.c.l.b16 %v168
    %v469 = vunpack.c.h.b16 %v168
    %v470 = vunpack.c.l.b16 %v169
    %v471 = vunpack.c.h.b16 %v169
    %v472 = vunpack.c.l.b16 %v170
    %v473 = vunpack.c.h.b16 %v170
    %v474 = vunpack.c.l.b16 %v171
    %v475 = vunpack.c.h.b16 %v171
    %v476 = vunpack.c.l.b16 %v172
    %v477 = vunpack.c.h.b16 %v172
    %v478 = vunpack.c.l.b16 %v173
    %v479 = vunpack.c.h.b16 %v173
    %v480 = vunpack.c.l.b16 %v174
    %v481 = vunpack.c.h.b16 %v174
    %v482 = vunpack.c.l.b16 %v175
    %v483 = vunpack.c.h.b16 %v175
    %v484 = vunpack.c.l.b16 %v176
    %v485 = vunpack.c.h.b16 %v176
    %v486 = vunpack.c.l.b16 %v177
    %v487 = vunpack.c.h.b16 %v177
    %v488 = vunpack.c.l.b16 %v178
    %v489 = vunpack.c.h.b16 %v178
    %v490 = vunpack.c.l.b16 %v179
    %v491 = vunpack.c.h.b16 %v179
    %v492 = vunpack.c.l.b16 %v180
    %v493 = vunpack.c.h.b16 %v180
    %v494 = vunpack.c.l.b16 %v181
    %v495 = vunpack.c.h.b16 %v181
    %v496 = vunpack.c.l.b16 %v182
    %v497 = vunpack.c.h.b16 %v182
    %v498 = vunpack.c.l.b16 %v183
    %v499 = vunpack.c.h.b16 %v183
    %v500 = vunpack.c.l.b16 %v184
    %v501 = vunpack.c.h.b16 %v184
    %v502 = vunpack.c.l.b16 %v185
    %v503 = vunpack.c.h.b16 %v185
    %v504 = vunpack.c.l.b16 %v186
    %v505 = vunpack.c.h.b16 %v186
    %v506 = vunpack.c.l.b16 %v187
    %v507 = vunpack.c.h.b16 %v187
    %v508 = vunpack.c.l.b16 %v188
    %v509 = vunpack.c.h.b16 %v188
    %v510 = vunpack.c.l.b16 %v189
    %v511 = vunpack.c.h.b16 %v189
    %v512 = vunpack.c.l.b16 %v190
    %v513 = vunpack.c.h.b16 %v190
    %v514 = vunpack.c.l.b16 %v191
    %v515 = vunpack.c.h.b16 %v191
    %v516 = vunpack.c.l.b16 %v192
    %v517 = vunpack.c.h.b16 %v192
    %v518 = vunpack.c.l.b16 %v193
    %v519 = vunpack.c.h.b16 %v193
    %v520 = vunpack.c.l.b16 %v194
    %v521 = vunpack.c.h.b16 %v194
    %v522 = vunpack.c.l.b16 %v195
    %v523 = vunpack.c.h.b16 %v195
    %v524 = vunpack.c.l.b16 %v196
    %v525 = vunpack.c.h.b16 %v196
    %v526 = vunpack.c.l.b16 %v197
    %v527 = vunpack.c.h.b16 %v197
    %v528 = vunpack.c.l.b16 %v198
    %v529 = vunpack.c.h.b16 %v198
    %v530 = vunpack.c.l.b16 %v199
    %v531 = vunpack.c.h.b16 %v199
    %v532 = vunpack.c.l.b16 %v200
    %v533 = vunpack.c.h.b16 %v200
    %v534 = vunpack.c.l.b16 %v201
    %v535 = vunpack.c.h.b16 %v201
    %v536 = vunpack.c.l.b16 %v202
    %v537 = vunpack.c.h.b16 %v202
    %v538 = vunpack.c.l.b16 %v203
    %v539 = vunpack.c.h.b16 %v203
    %v540 = vunpack.c.l.b16 %v204
    %v541 = vunpack.c.h.b16 %v204
    %v542 = vunpack.c.l.b16 %v205
    %v543 = vunpack.c.h.b16 %v205
    %v544 = vunpack.c.l.b16 %v206
    %v545 = vunpack.c.h.b16 %v206
    %v546 = vunpack.c.l.b16 %v207
    %v547 = vunpack.c.h.b16 %v207
    %v548 = vunpack.c.l.b16 %v208
    %v549 = vunpack.c.h.b16 %v208
    %v550 = vunpack.c.l.b16 %v209
    %v551 = vunpack.c.h.b16 %v209
    %v552 = vunpack.c.l.b16 %v210
    %v553 = vunpack.c.h.b16 %v210
    %v554 = vunpack.c.l.b16 %v211
    %v555 = vunpack.c.h.b16 %v211
    %v556 = vunpack.c.l.b16 %v212
    %v557 = vunpack.c.h.b16 %v212
    %v558 = vunpack.c.l.b16 %v213
    %v559 = vunpack.c.h.b16 %v213
    %v560 = vunpack.c.l.b16 %v214
    %v561 = vunpack.c.h.b16 %v214
    %v562 = vunpack.c.l.b16 %v215
    %v563 = vunpack.c.h.b16 %v215
    %v564 = vunpack.c.l.b16 %v216
    %v565 = vunpack.c.h.b16 %v216
    %v566 = vunpack.c.l.b16 %v217
    %v567 = vunpack.c.h.b16 %v217
    %v568 = vunpack.c.l.b16 %v218
    %v569 = vunpack.c.h.b16 %v218
    %v570 = vunpack.c.l.b16 %v219
    %v571 = vunpack.c.h.b16 %v219
    %v572 = vunpack.c.l.b16 %v220
    %v573 = vunpack.c.h.b16 %v220
    %v574 = vunpack.c.l.b16 %v221
    %v575 = vunpack.c.h.b16 %v221
    %v576 = vunpack.c.l.b16 %v222
    %v577 = vunpack.c.h.b16 %v222
    %v578 = vunpack.c.l.b16 %v223
    %v579 = vunpack.c.h.b16 %v223
    %v580 = vunpack.c.l.b16 %v224
    %v581 = vunpack.c.h.b16 %v224
    %v582 = vunpack.c.l.b16 %v225
    %v583 = vunpack.c.h.b16 %v225
    %v584 = vunpack.c.l.b16 %v226
    %v585 = vunpack.c.h.b16 %v226
    %v586 = vunpack.c.l.b16 %v227
    %v587 = vunpack.c.h.b16 %v227
    %v588 = vunpack.c.l.b16 %v228
    %v589 = vunpack.c.h.b16 %v228
    %v590 = vunpack.c.l.b16 %v229
    %v591 = vunpack.c.h.b16 %v229
    %v592 = vunpack.c.l.b16 %v230
    %v593 = vunpack.c.h.b16 %v230
    %v594 = vunpack.c.l.b16 %v231
    %v595 = vunpack.c.h.b16 %v231
    %v596 = vunpack.c.l.b16 %v232
    %v597 = vunpack.c.h.b16 %v232
    %v598 = vunpack.c.l.b16 %v233
    %v599 = vunpack.c.h.b16 %v233
    %v600 = vunpack.c.l.b16 %v234
    %v601 = vunpack.c.h.b16 %v234
    %v602 = vunpack.c.l.b16 %v235
    %v603 = vunpack.c.h.b16 %v235
    %v604 = vunpack.c.l.b16 %v236
    %v605 = vunpack.c.h.b16 %v236
    %v606 = vunpack.c.l.b16 %v237
    %v607 = vunpack.c.h.b16 %v237
    %v608 = vunpack.c.l.b16 %v238
    %v609 = vunpack.c.h.b16 %v238
    %v610 = vunpack.c.l.b16 %v239
    %v611 = vunpack.c.h.b16 %v239
    %v612 = vunpack.c.l.b16 %v240
    %v613 = vunpack.c.h.b16 %v240
    %v614 = vunpack.c.l.b16 %v241
    %v615 = vunpack.c.h.b16 %v241
    %v616 = vunpack.c.l.b16 %v242
    %v617 = vunpack.c.h.b16 %v242
    %v618 = vunpack.c.l.b16 %v243
    %v619 = vunpack.c.h.b16 %v243
    %v620 = vunpack.c.l.b16 %v244
    %v621 = vunpack.c.h.b16 %v244
    %v622 = vunpack.c.l.b16 %v245
    %v623 = vunpack.c.h.b16 %v245
    %v624 = vunpack.c.l.b16 %v246
    %v625 = vunpack.c.h.b16 %v246
    %v626 = vunpack.c.l.b16 %v247
    %v627 = vunpack.c.h.b16 %v247
    %v628 = vunpack.c.l.b16 %v248
    %v629 = vunpack.c.h.b16 %v248
    %v630 = vunpack.c.l.b16 %v249
    %v631 = vunpack.c.h.b16 %v249
    %v632 = vunpack.c.l.b16 %v250
    %v633 = vunpack.c.h.b16 %v250
    %v634 = vunpack.c.l.b16 %v251
    %v635 = vunpack.c.h.b16 %v251
    %v636 = vunpack.c.l.b16 %v252
    %v637 = vunpack.c.h.b16 %v252
    %v638 = vunpack.c.l.b16 %v253
    %v639 = vunpack.c.h.b16 %v253
    %v640 = vunpack.c.l.b16 %v254
    %v641 = vunpack.c.h.b16 %v254
    %v642 = vunpack.c.l.b16 %v255
    %v643 = vunpack.c.h.b16 %v255
    %v644 = vunpack.c.l.b16 %v256
    %v645 = vunpack.c.h.b16 %v256
    %v646 = vunpack.c.l.b16 %v257
    %v647 = vunpack.c.h.b16 %v257
    %v648 = vunpack.c.l.b16 %v258
    %v649 = vunpack.c.h.b16 %v258
    %v650 = vunpack.c.l.b16 %v259
    %v651 = vunpack.c.h.b16 %v259
    %v652 = vunpack.c.l.b16 %v260
    %v653 = vunpack.c.h.b16 %v260
    %v654 = vunpack.c.l.b16 %v261
    %v655 = vunpack.c.h.b16 %v261
    %v656 = vunpack.c.l.b16 %v262
    %v657 = vunpack.c.h.b16 %v262
    %v658 = vunpack.c.l.b16 %v263
    %v659 = vunpack.c.h.b16 %v263
    %v660 = vunpack.c.l.b16 %v264
    %v661 = vunpack.c.h.b16 %v264
    %v662 = vunpack.c.l.b16 %v265
    %v663 = vunpack.c.h.b16 %v265
    %v664 = vunpack.c.l.b16 %v266
    %v665 = vunpack.c.h.b16 %v266
    %v666 = vunpack.c.l.b16 %v267
    %v667 = vunpack.c.h.b16 %v267
    %v668 = vunpack.c.l.b16 %v268
    %v669 = vunpack.c.h.b16 %v268
    %v670 = vunpack.c.l.b16 %v269
    %v671 = vunpack.c.h.b16 %v269
    %v672 = vunpack.c.l.b16 %v270
    %v673 = vunpack.c.h.b16 %v270
    %v674 = vunpack.c.l.b16 %v271
    %v675 = vunpack.c.h.b16 %v271
    %v676 = vunpack.c.l.b16 %v272
    %v677 = vunpack.c.h.b16 %v272
    %v678 = vunpack.c.l.b16 %v273
    %v679 = vunpack.c.h.b16 %v273
    %v680 = vunpack.c.l.b16 %v274
    %v681 = vunpack.c.h.b16 %v274
    %v682 = vunpack.c.l.b16 %v275
    %v683 = vunpack.c.h.b16 %v275
    %v684 = vunpack.c.l.b16 %v276
    %v685 = vunpack.c.h.b16 %v276
    %v686 = vunpack.c.l.b16 %v277
    %v687 = vunpack.c.h.b16 %v277
    %v688 = vunpack.c.l.b16 %v278
    %v689 = vunpack.c.h.b16 %v278
    %v690 = vunpack.c.l.b16 %v279
    %v691 = vunpack.c.h.b16 %v279
    %v692 = vunpack.c.l.b16 %v280
    %v693 = vunpack.c.h.b16 %v280
    %v694 = vunpack.c.l.b16 %v281
    %v695 = vunpack.c.h.b16 %v281
    %v696 = vunpack.c.l.b16 %v282
    %v697 = vunpack.c.h.b16 %v282
    %v698 = vunpack.c.l.b16 %v283
    %v699 = vunpack.c.h.b16 %v283
    %v700 = vunpack.c.l.b16 %v284
    %v701 = vunpack.c.h.b16 %v284
    %v702 = vunpack.c.l.b16 %v285
    %v703 = vunpack.c.h.b16 %v285
    %v704 = vunpack.c.l.b16 %v286
    %v705 = vunpack.c.h.b16 %v286
    %v706 = vunpack.c.l.b16 %v287
    %v707 = vunpack.c.h.b16 %v287
    %v708 = vunpack.c.l.b16 %v288
    %v709 = vunpack.c.h.b16 %v288
    %v710 = vunpack.c.l.b16 %v289
    %v711 = vunpack.c.h.b16 %v289
    %v712 = vunpack.c.l.b16 %v290
    %v713 = vunpack.c.h.b16 %v290
    %v714 = vunpack.c.l.b16 %v291
    %v715 = vunpack.c.h.b16 %v291
    %v716 = vunpack.c.l.b16 %v292
    %v717 = vunpack.c.h.b16 %v292
    %v718 = vunpack.c.l.b16 %v293
    %v719 = vunpack.c.h.b16 %v293
    %v720 = vunpack.c.l.b16 %v294
    %v721 = vunpack.c.h.b16 %v294
    %v722 = vunpack.c.l.b16 %v295
    %v723 = vunpack.c.h.b16 %v295
    %v724 = vpack.c.b16 %v470, %v468
    %v725 = vpack.c.b16 %v471, %v469
    %v726 = vpack.c.b16 %v474, %v472
    %v727 = vpack.c.b16 %v475, %v473
    %v728 = vpack.c.b16 %v478, %v476
    %v729 = vpack.c.b16 %v479, %v477
    %v730 = vpack.c.b16 %v482, %v480
    %v731 = vpack.c.b16 %v483, %v481
    %v732 = vpack.c.b16 %v486, %v484
    %v733 = vpack.c.b16 %v487, %v485
    %v734 = vpack.c.b16 %v490, %v488
    %v735 = vpack.c.b16 %v491, %v489
    %v736 = vpack.c.b16 %v494, %v492
    %v737 = vpack.c.b16 %v495, %v493
    %v738 = vpack.c.b16 %v498, %v496
    %v739 = vpack.c.b16 %v499, %v497
    %v740 = vpack.c.b16 %v502, %v500
    %v741 = vpack.c.b16 %v503, %v501
    %v742 = vpack.c.b16 %v506, %v504
    %v743 = vpack.c.b16 %v507, %v505
    %v744 = vpack.c.b16 %v510, %v508
    %v745 = vpack.c.b16 %v511, %v509
    %v746 = vpack.c.b16 %v514, %v512
    %v747 = vpack.c.b16 %v515, %v513
    %v748 = vpack.c.b16 %v518, %v516
    %v749 = vpack.c.b16 %v519, %v517
    %v750 = vpack.c.b16 %v522, %v520
    %v751 = vpack.c.b16 %v523, %v521
    %v752 = vpack.c.b16 %v526, %v524
    %v753 = vpack.c.b16 %v527, %v525
    %v754 = vpack.c.b16 %v530, %v528
    %v755 = vpack.c.b16 %v531, %v529
    %v756 = vpack.c.b16 %v534, %v532
    %v757 = vpack.c.b16 %v535, %v533
    %v758 = vpack.c.b16 %v538, %v536
    %v759 = vpack.c.b16 %v539, %v537
    %v760 = vpack.c.b16 %v542, %v540
    %v761 = vpack.c.b16 %v543, %v541
    %v762 = vpack.c.b16 %v546, %v544
    %v763 = vpack.c.b16 %v547, %v545
    %v764 = vpack.c.b16 %v550, %v548
    %v765 = vpack.c.b16 %v551, %v549
    %v766 = vpack.c.b16 %v554, %v552
    %v767 = vpack.c.b16 %v555, %v553
    %v768 = vpack.c.b16 %v558, %v556
    %v769 = vpack.c.b16 %v559, %v557
    %v770 = vpack.c.b16 %v562, %v560
    %v771 = vpack.c.b16 %v563, %v561
    %v772 = vpack.c.b16 %v566, %v564
    %v773 = vpack.c.b16 %v567, %v565
    %v774 = vpack.c.b16 %v570, %v568
    %v775 = vpack.c.b16 %v571, %v569
    %v776 = vpack.c.b16 %v574, %v572
    %v777 = vpack.c.b16 %v575, %v573
    %v778 = vpack.c.b16 %v578, %v576
    %v779 = vpack.c.b16 %v579, %v577
    %v780 = vpack.c.b16 %v582, %v580
    %v781 = vpack.c.b16 %v583, %v581
    %v782 = vpack.c.b16 %v586, %v584
    %v783 = vpack.c.b16 %v587, %v585
    %v784 = vpack.c.b16 %v590, %v588
    %v785 = vpack.c.b16 %v591, %v589
    %v786 = vpack.c.b16 %v594, %v592
    %v787 = vpack.c.b16 %v595, %v593
    %v788 = vpack.c.b16 %v598, %v596
    %v789 = vpack.c.b16 %v599, %v597
    %v790 = vpack.c.b16 %v602, %v600
    %v791 = vpack.c.b16 %v603, %v601
    %v792 = vpack.c.b16 %v606, %v604
    %v793 = vpack.c.b16 %v607, %v605
    %v794 = vpack.c.b16 %v610, %v608
    %v795 = vpack.c.b16 %v611, %v609
    %v796 = vpack.c.b16 %v614, %v612
    %v797 = vpack.c.b16 %v615, %v613
    %v798 = vpack.c.b16 %v618, %v616
    %v799 = vpack.c.b16 %v619, %v617
    %v800 = vpack.c.b16 %v622, %v620
    %v801 = vpack.c.b16 %v623, %v621
    %v802 = vpack.c.b16 %v626, %v624
    %v803 = vpack.c.b16 %v627, %v625
    %v804 = vpack.c.b16 %v630, %v628
    %v805 = vpack.c.b16 %v631, %v629
    %v806 = vpack.c.b16 %v634, %v632
    %v807 = vpack.c.b16 %v635, %v633
    %v808 = vpack.c.b16 %v638, %v636
    %v809 = vpack.c.b16 %v639, %v637
    %v810 = vpack.c.b16 %v642, %v640
    %v811 = vpack.c.b16 %v643, %v641
    %v812 = vpack.c.b16 %v646, %v644
    %v813 = vpack.c.b16 %v647, %v645
    %v814 = vpack.c.b16 %v650, %v648
    %v815 = vpack.c.b16 %v651, %v649
    %v816 = vpack.c.b16 %v654, %v652
    %v817 = vpack.c.b16 %v655, %v653
    %v818 = vpack.c.b16 %v658, %v656
    %v819 = vpack.c.b16 %v659, %v657
    %v820 = vpack.c.b16 %v662, %v660
    %v821 = vpack.c.b16 %v663, %v661
    %v822 = vpack.c.b16 %v666, %v664
    %v823 = vpack.c.b16 %v667, %v665
    %v824 = vpack.c.b16 %v670, %v668
    %v825 = vpack.c.b16 %v671, %v669
    %v826 = vpack.c.b16 %v674, %v672
    %v827 = vpack.c.b16 %v675, %v673
    %v828 = vpack.c.b16 %v678, %v676
    %v829 = vpack.c.b16 %v679, %v677
    %v830 = vpack.c.b16 %v682, %v680
    %v831 = vpack.c.b16 %v683, %v681
    %v832 = vpack.c.b16 %v686, %v684
    %v833 = vpack.c.b16 %v687, %v685
    %v834 = vpack.c.b16 %v690, %v688
    %v835 = vpack.c.b16 %v691, %v689
    %v836 = vpack.c.b16 %v694, %v692
    %v837 = vpack.c.b16 %v695, %v693
    %v838 = vpack.c.b16 %v698, %v696
    %v839 = vpack.c.b16 %v699, %v697
    %v840 = vpack.c.b16 %v702, %v700
    %v841 = vpack.c.b16 %v703, %v701
    %v842 = vpack.c.b16 %v706, %v704
    %v843 = vpack.c.b16 %v707, %v705
    %v844 = vpack.c.b16 %v710, %v708
    %v845 = vpack.c.b16 %v711, %v709
    %v846 = vpack.c.b16 %v714, %v712
    %v847 = vpack.c.b16 %v715, %v713
    %v848 = vpack.c.b16 %v718, %v716
    %v849 = vpack.c.b16 %v719, %v717
    %v850 = vpack.c.b16 %v722, %v720
    %v851 = vpack.c.b16 %v723, %v721
    %980 = vmatpush.bf16.msra.mxu0 %v738
    %981 = vmatpush.bf16.msra.mxu0 %v736
    %982 = vmatpush.bf16.msra.mxu0 %v734
    %983 = vmatpush.bf16.msra.mxu0 %v732
    %984 = vmatpush.bf16.msra.mxu0 %v730
    %985 = vmatpush.bf16.msra.mxu0 %v728
    %986 = vmatpush.bf16.msra.mxu0 %v726
    %987 = vmatpush.bf16.msra.mxu0 %v724
    %988 = vmatmul.bf16.gmra.mxu0 %v160
    %v989 = vpop.f32.mrf.mxu0
    %v990 = vadd.f32 %v324, %v989
    %v991 = vpop.f32.mrf.mxu0
    %992 = vdwg.mxu0
    %993 = vmatpush.bf16.msra.mxu0 %v754
    %994 = vmatpush.bf16.msra.mxu0 %v752
    %995 = vmatpush.bf16.msra.mxu0 %v750
    %996 = vmatpush.bf16.msra.mxu0 %v748
    %997 = vmatpush.bf16.msra.mxu0 %v746
    %998 = vmatpush.bf16.msra.mxu0 %v744
    %999 = vmatpush.bf16.msra.mxu0 %v742
    %1000 = vmatpush.bf16.msra.mxu0 %v740
    %1001 = vmatmul.bf16.gmra.mxu0 %v161
    %v1002 = vpop.f32.mrf.mxu0
    %v1003 = vadd.f32 %v990, %v1002
    %v1004 = vpop.f32.mrf.mxu0
    %1005 = vdwg.mxu0
    %1006 = vmatpush.bf16.msra.mxu0 %v770
    %1007 = vmatpush.bf16.msra.mxu0 %v768
    %1008 = vmatpush.bf16.msra.mxu0 %v766
    %1009 = vmatpush.bf16.msra.mxu0 %v764
    %1010 = vmatpush.bf16.msra.mxu0 %v762
    %1011 = vmatpush.bf16.msra.mxu0 %v760
    %1012 = vmatpush.bf16.msra.mxu0 %v758
    %1013 = vmatpush.bf16.msra.mxu0 %v756
    %1014 = vmatmul.bf16.gmra.mxu0 %v162
    %v1015 = vpop.f32.mrf.mxu0
    %v1016 = vadd.f32 %v1003, %v1015
    %v1017 = vpop.f32.mrf.mxu0
    %1018 = vdwg.mxu0
    %1019 = vmatpush.bf16.msra.mxu0 %v786
    %1020 = vmatpush.bf16.msra.mxu0 %v784
    %1021 = vmatpush.bf16.msra.mxu0 %v782
    %1022 = vmatpush.bf16.msra.mxu0 %v780
    %1023 = vmatpush.bf16.msra.mxu0 %v778
    %1024 = vmatpush.bf16.msra.mxu0 %v776
    %1025 = vmatpush.bf16.msra.mxu0 %v774
    %1026 = vmatpush.bf16.msra.mxu0 %v772
    %1027 = vmatmul.bf16.gmra.mxu0 %v163
    %v1028 = vpop.f32.mrf.mxu0
    %v1029 = vadd.f32 %v1016, %v1028
    %v1030 = vpop.f32.mrf.mxu0
    %1031 = vdwg.mxu0
    %1032 = vmatpush.bf16.msra.mxu0 %v802
    %1033 = vmatpush.bf16.msra.mxu0 %v800
    %1034 = vmatpush.bf16.msra.mxu0 %v798
    %1035 = vmatpush.bf16.msra.mxu0 %v796
    %1036 = vmatpush.bf16.msra.mxu0 %v794
    %1037 = vmatpush.bf16.msra.mxu0 %v792
    %1038 = vmatpush.bf16.msra.mxu0 %v790
    %1039 = vmatpush.bf16.msra.mxu0 %v788
    %1040 = vmatmul.bf16.gmra.mxu0 %v164
    %v1041 = vpop.f32.mrf.mxu0
    %v1042 = vadd.f32 %v1029, %v1041
    %v1043 = vpop.f32.mrf.mxu0
    %1044 = vdwg.mxu0
    %1045 = vmatpush.bf16.msra.mxu0 %v818
    %1046 = vmatpush.bf16.msra.mxu0 %v816
    %1047 = vmatpush.bf16.msra.mxu0 %v814
    %1048 = vmatpush.bf16.msra.mxu0 %v812
    %1049 = vmatpush.bf16.msra.mxu0 %v810
    %1050 = vmatpush.bf16.msra.mxu0 %v808
    %1051 = vmatpush.bf16.msra.mxu0 %v806
    %1052 = vmatpush.bf16.msra.mxu0 %v804
    %1053 = vmatmul.bf16.gmra.mxu0 %v165
    %v1054 = vpop.f32.mrf.mxu0
    %v1055 = vadd.f32 %v1042, %v1054
    %v1056 = vpop.f32.mrf.mxu0
    %1057 = vdwg.mxu0
    %1058 = vmatpush.bf16.msra.mxu0 %v834
    %1059 = vmatpush.bf16.msra.mxu0 %v832
    %1060 = vmatpush.bf16.msra.mxu0 %v830
    %1061 = vmatpush.bf16.msra.mxu0 %v828
    %1062 = vmatpush.bf16.msra.mxu0 %v826
    %1063 = vmatpush.bf16.msra.mxu0 %v824
    %1064 = vmatpush.bf16.msra.mxu0 %v822
    %1065 = vmatpush.bf16.msra.mxu0 %v820
    %1066 = vmatmul.bf16.gmra.mxu0 %v166
    %v1067 = vpop.f32.mrf.mxu0
    %v1068 = vadd.f32 %v1055, %v1067
    %v1069 = vpop.f32.mrf.mxu0
    %1070 = vdwg.mxu0
    %1071 = vmatpush.bf16.msra.mxu0 %v850
    %1072 = vmatpush.bf16.msra.mxu0 %v848
    %1073 = vmatpush.bf16.msra.mxu0 %v846
    %1074 = vmatpush.bf16.msra.mxu0 %v844
    %1075 = vmatpush.bf16.msra.mxu0 %v842
    %1076 = vmatpush.bf16.msra.mxu0 %v840
    %1077 = vmatpush.bf16.msra.mxu0 %v838
    %1078 = vmatpush.bf16.msra.mxu0 %v836
    %1079 = vmatmul.bf16.gmra.mxu0 %v167
    %v1080 = vpop.f32.mrf.mxu0
    %v1081 = vadd.f32 %v1068, %v1080
    %v1082 = vpop.f32.mrf.mxu0
    %1083 = vdwg.mxu0
    %1084 = vmatpush.bf16.msra.mxu0 %v739
    %1085 = vmatpush.bf16.msra.mxu0 %v737
    %1086 = vmatpush.bf16.msra.mxu0 %v735
    %1087 = vmatpush.bf16.msra.mxu0 %v733
    %1088 = vmatpush.bf16.msra.mxu0 %v731
    %1089 = vmatpush.bf16.msra.mxu0 %v729
    %1090 = vmatpush.bf16.msra.mxu0 %v727
    %1091 = vmatpush.bf16.msra.mxu0 %v725
    %1092 = vmatmul.bf16.gmra.mxu0 %v160
    %v1093 = vpop.f32.mrf.mxu0
    %v1094 = vadd.f32 %v337, %v1093
    %v1095 = vpop.f32.mrf.mxu0
    %1096 = vdwg.mxu0
    %1097 = vmatpush.bf16.msra.mxu0 %v755
    %1098 = vmatpush.bf16.msra.mxu0 %v753
    %1099 = vmatpush.bf16.msra.mxu0 %v751
    %1100 = vmatpush.bf16.msra.mxu0 %v749
    %1101 = vmatpush.bf16.msra.mxu0 %v747
    %1102 = vmatpush.bf16.msra.mxu0 %v745
    %1103 = vmatpush.bf16.msra.mxu0 %v743
    %1104 = vmatpush.bf16.msra.mxu0 %v741
    %1105 = vmatmul.bf16.gmra.mxu0 %v161
    %v1106 = vpop.f32.mrf.mxu0
    %v1107 = vadd.f32 %v1094, %v1106
    %v1108 = vpop.f32.mrf.mxu0
    %1109 = vdwg.mxu0
    %1110 = vmatpush.bf16.msra.mxu0 %v771
    %1111 = vmatpush.bf16.msra.mxu0 %v769
    %1112 = vmatpush.bf16.msra.mxu0 %v767
    %1113 = vmatpush.bf16.msra.mxu0 %v765
    %1114 = vmatpush.bf16.msra.mxu0 %v763
    %1115 = vmatpush.bf16.msra.mxu0 %v761
    %1116 = vmatpush.bf16.msra.mxu0 %v759
    %1117 = vmatpush.bf16.msra.mxu0 %v757
    %1118 = vmatmul.bf16.gmra.mxu0 %v162
    %v1119 = vpop.f32.mrf.mxu0
    %v1120 = vadd.f32 %v1107, %v1119
    %v1121 = vpop.f32.mrf.mxu0
    %1122 = vdwg.mxu0
    %1123 = vmatpush.bf16.msra.mxu0 %v787
    %1124 = vmatpush.bf16.msra.mxu0 %v785
    %1125 = vmatpush.bf16.msra.mxu0 %v783
    %1126 = vmatpush.bf16.msra.mxu0 %v781
    %1127 = vmatpush.bf16.msra.mxu0 %v779
    %1128 = vmatpush.bf16.msra.mxu0 %v777
    %1129 = vmatpush.bf16.msra.mxu0 %v775
    %1130 = vmatpush.bf16.msra.mxu0 %v773
    %1131 = vmatmul.bf16.gmra.mxu0 %v163
    %v1132 = vpop.f32.mrf.mxu0
    %v1133 = vadd.f32 %v1120, %v1132
    %v1134 = vpop.f32.mrf.mxu0
    %1135 = vdwg.mxu0
    %1136 = vmatpush.bf16.msra.mxu0 %v803
    %1137 = vmatpush.bf16.msra.mxu0 %v801
    %1138 = vmatpush.bf16.msra.mxu0 %v799
    %1139 = vmatpush.bf16.msra.mxu0 %v797
    %1140 = vmatpush.bf16.msra.mxu0 %v795
    %1141 = vmatpush.bf16.msra.mxu0 %v793
    %1142 = vmatpush.bf16.msra.mxu0 %v791
    %1143 = vmatpush.bf16.msra.mxu0 %v789
    %1144 = vmatmul.bf16.gmra.mxu0 %v164
    %v1145 = vpop.f32.mrf.mxu0
    %v1146 = vadd.f32 %v1133, %v1145
    %v1147 = vpop.f32.mrf.mxu0
    %1148 = vdwg.mxu0
    %1149 = vmatpush.bf16.msra.mxu0 %v819
    %1150 = vmatpush.bf16.msra.mxu0 %v817
    %1151 = vmatpush.bf16.msra.mxu0 %v815
    %1152 = vmatpush.bf16.msra.mxu0 %v813
    %1153 = vmatpush.bf16.msra.mxu0 %v811
    %1154 = vmatpush.bf16.msra.mxu0 %v809
    %1155 = vmatpush.bf16.msra.mxu0 %v807
    %1156 = vmatpush.bf16.msra.mxu0 %v805
    %1157 = vmatmul.bf16.gmra.mxu0 %v165
    %v1158 = vpop.f32.mrf.mxu0
    %v1159 = vadd.f32 %v1146, %v1158
    %v1160 = vpop.f32.mrf.mxu0
    %1161 = vdwg.mxu0
    %1162 = vmatpush.bf16.msra.mxu0 %v835
    %1163 = vmatpush.bf16.msra.mxu0 %v833
    %1164 = vmatpush.bf16.msra.mxu0 %v831
    %1165 = vmatpush.bf16.msra.mxu0 %v829
    %1166 = vmatpush.bf16.msra.mxu0 %v827
    %1167 = vmatpush.bf16.msra.mxu0 %v825
    %1168 = vmatpush.bf16.msra.mxu0 %v823
    %1169 = vmatpush.bf16.msra.mxu0 %v821
    %1170 = vmatmul.bf16.gmra.mxu0 %v166
    %v1171 = vpop.f32.mrf.mxu0
    %v1172 = vadd.f32 %v1159, %v1171
    %v1173 = vpop.f32.mrf.mxu0
    %1174 = vdwg.mxu0
    %1175 = vmatpush.bf16.msra.mxu0 %v851
    %1176 = vmatpush.bf16.msra.mxu0 %v849
    %1177 = vmatpush.bf16.msra.mxu0 %v847
    %1178 = vmatpush.bf16.msra.mxu0 %v845
    %1179 = vmatpush.bf16.msra.mxu0 %v843
    %1180 = vmatpush.bf16.msra.mxu0 %v841
    %1181 = vmatpush.bf16.msra.mxu0 %v839
    %1182 = vmatpush.bf16.msra.mxu0 %v837
    %1183 = vmatmul.bf16.gmra.mxu0 %v167
    %v1184 = vpop.f32.mrf.mxu0
    %v1185 = vadd.f32 %v1172, %v1184
    %v1186 = vpop.f32.mrf.mxu0
    %1187 = vdwg.mxu0
    %v1188 = vld [vmem:[#allocation5] sm:$0x3]
    %v1189 = vunpack.c.l.bf16 %v1188
    %v1191 = vperm.slane %v1189, 0
    %v1192 = vperm.slane %v1189, 2
    %v1195 = vperm.slane %v1191, 0
    %v1196 = vperm.slane %v1192, 0
    %v1197 = vadd.f32 %v1081, %v1195
    %v1198 = vadd.f32 %v1185, %v1196
    %v1199 = vmax.f32 %v1197, 0.0
    %v1200 = vmax.f32 %v1198, 0.0
    %v1201 = vpack.c.bf16 %v1199, %v1199
    %v1202 = vpack.c.bf16 %v1200, %v1200
    %v1203 = vld [vmem:[%s6] sm:$0xf]
    %v1204 = vld [vmem:[%s6 + $0x4] sm:$0xf]
    %v1205 = vld [vmem:[%s6 + $0x8] sm:$0xf]
    %v1206 = vld [vmem:[%s6 + $0xc] sm:$0xf]
    %v1207 = vld [vmem:[%s6 + $0x10] sm:$0xf]
    %v1208 = vld [vmem:[%s6 + $0x14] sm:$0xf]
    %v1209 = vld [vmem:[%s6 + $0x18] sm:$0xf]
    %v1210 = vld [vmem:[%s6 + $0x1c] sm:$0xf]
    %v1211 = vld [vmem:[%s6 + $0x20] sm:$0xf]
    %v1212 = vld [vmem:[%s6 + $0x24] sm:$0xf]
    %v1213 = vld [vmem:[%s6 + $0x28] sm:$0xf]
    %v1214 = vld [vmem:[%s6 + $0x2c] sm:$0xf]
    %v1215 = vld [vmem:[%s6 + $0x30] sm:$0xf]
    %v1216 = vld [vmem:[%s6 + $0x34] sm:$0xf]
    %v1217 = vld [vmem:[%s6 + $0x38] sm:$0xf]
    %v1218 = vld [vmem:[%s6 + $0x3c] sm:$0xf]
    %v1219 = vld [vmem:[%s6 + $0x40] sm:$0xf]
    %v1220 = vld [vmem:[%s6 + $0x44] sm:$0xf]
    %v1221 = vld [vmem:[%s6 + $0x48] sm:$0xf]
    %v1222 = vld [vmem:[%s6 + $0x4c] sm:$0xf]
    %v1223 = vld [vmem:[%s6 + $0x50] sm:$0xf]
    %v1224 = vld [vmem:[%s6 + $0x54] sm:$0xf]
    %v1225 = vld [vmem:[%s6 + $0x58] sm:$0xf]
    %v1226 = vld [vmem:[%s6 + $0x5c] sm:$0xf]
    %v1227 = vld [vmem:[%s6 + $0x60] sm:$0xf]
    %v1228 = vld [vmem:[%s6 + $0x64] sm:$0xf]
    %v1229 = vld [vmem:[%s6 + $0x68] sm:$0xf]
    %v1230 = vld [vmem:[%s6 + $0x6c] sm:$0xf]
    %v1231 = vld [vmem:[%s6 + $0x70] sm:$0xf]
    %v1232 = vld [vmem:[%s6 + $0x74] sm:$0xf]
    %v1233 = vld [vmem:[%s6 + $0x78] sm:$0xf]
    %v1234 = vld [vmem:[%s6 + $0x7c] sm:$0xf]
    %v1235 = vld [vmem:[%s7] sm:$0x1]
    %v1236 = vunpack.c.l.bf16 %v1235
    %v1237 = vperm.slane %v1236, 0
    %v1270 = vunpack.c.l.b16 %v1203
    %v1271 = vunpack.c.l.b16 %v1204
    %v1272 = vunpack.c.l.b16 %v1205
    %v1273 = vunpack.c.l.b16 %v1206
    %v1274 = vunpack.c.l.b16 %v1207
    %v1275 = vunpack.c.l.b16 %v1208
    %v1276 = vunpack.c.l.b16 %v1209
    %v1277 = vunpack.c.l.b16 %v1210
    %v1278 = vunpack.c.l.b16 %v1211
    %v1279 = vunpack.c.l.b16 %v1212
    %v1280 = vunpack.c.l.b16 %v1213
    %v1281 = vunpack.c.l.b16 %v1214
    %v1282 = vunpack.c.l.b16 %v1215
    %v1283 = vunpack.c.l.b16 %v1216
    %v1284 = vunpack.c.l.b16 %v1217
    %v1285 = vunpack.c.l.b16 %v1218
    %v1286 = vunpack.c.l.b16 %v1219
    %v1287 = vunpack.c.l.b16 %v1220
    %v1288 = vunpack.c.l.b16 %v1221
    %v1289 = vunpack.c.l.b16 %v1222
    %v1290 = vunpack.c.l.b16 %v1223
    %v1291 = vunpack.c.l.b16 %v1224
    %v1292 = vunpack.c.l.b16 %v1225
    %v1293 = vunpack.c.l.b16 %v1226
    %v1294 = vunpack.c.l.b16 %v1227
    %v1295 = vunpack.c.l.b16 %v1228
    %v1296 = vunpack.c.l.b16 %v1229
    %v1297 = vunpack.c.l.b16 %v1230
    %v1298 = vunpack.c.l.b16 %v1231
    %v1299 = vunpack.c.l.b16 %v1232
    %v1300 = vunpack.c.l.b16 %v1233
    %v1301 = vunpack.c.l.b16 %v1234
    %v1302 = vpack.c.b16 %v1271, %v1270
    %v1303 = vpack.c.b16 %v1273, %v1272
    %v1304 = vpack.c.b16 %v1275, %v1274
    %v1305 = vpack.c.b16 %v1277, %v1276
    %v1306 = vpack.c.b16 %v1279, %v1278
    %v1307 = vpack.c.b16 %v1281, %v1280
    %v1308 = vpack.c.b16 %v1283, %v1282
    %v1309 = vpack.c.b16 %v1285, %v1284
    %v1310 = vpack.c.b16 %v1287, %v1286
    %v1311 = vpack.c.b16 %v1289, %v1288
    %v1312 = vpack.c.b16 %v1291, %v1290
    %v1313 = vpack.c.b16 %v1293, %v1292
    %v1314 = vpack.c.b16 %v1295, %v1294
    %v1315 = vpack.c.b16 %v1297, %v1296
    %v1316 = vpack.c.b16 %v1299, %v1298
    %v1317 = vpack.c.b16 %v1301, %v1300
    %1334 = vmatpush.bf16.msra.mxu0 %v1309
    %1335 = vmatpush.bf16.msra.mxu0 %v1308
    %1336 = vmatpush.bf16.msra.mxu0 %v1307
    %1337 = vmatpush.bf16.msra.mxu0 %v1306
    %1338 = vmatpush.bf16.msra.mxu0 %v1305
    %1339 = vmatpush.bf16.msra.mxu0 %v1304
    %1340 = vmatpush.bf16.msra.mxu0 %v1303
    %1341 = vmatpush.bf16.msra.mxu0 %v1302
    %1342 = vmatmul.bf16.gmra.mxu0 %v1201
    %v1343 = vpop.f32.mrf.mxu0
    %v1344 = vadd.f32 %v1237, %v1343
    %v1345 = vpop.f32.mrf.mxu0
    %1346 = vdwg.mxu0
    %1347 = vmatpush.bf16.msra.mxu0 %v1317
    %1348 = vmatpush.bf16.msra.mxu0 %v1316
    %1349 = vmatpush.bf16.msra.mxu0 %v1315
    %1350 = vmatpush.bf16.msra.mxu0 %v1314
    %1351 = vmatpush.bf16.msra.mxu0 %v1313
    %1352 = vmatpush.bf16.msra.mxu0 %v1312
    %1353 = vmatpush.bf16.msra.mxu0 %v1311
    %1354 = vmatpush.bf16.msra.mxu0 %v1310
    %1355 = vmatmul.bf16.gmra.mxu0 %v1202
    %v1356 = vpop.f32.mrf.mxu0
    %v1357 = vadd.f32 %v1344, %v1356
    %v1358 = vpop.f32.mrf.mxu0
    %1359 = vdwg.mxu0
    %v1360 = vmul.f32 %v1357, 0.5
    %v1361 = vmul.f32 %v1360, 1.442695
    %v1362 = vpow.pop %v1361
    %v1363 = vld [vmem:[%s2] sm:$0x3]
    %1365 = vrot.lane.b32.xlu0 %v1363, 32
    %v1366 = vpop.permute.xlu0 %1365
    %v1368 = vmul.f32 %v1362, %v1366
    %1370 = vrot.lane.b32.xlu0 %v1368, 96
    %v1371 = vpop.permute.xlu0 %1370
    %v1373 = vadd.f32 %v1357, %v1371
    %v1374 = vpack.c.bf16 %v1373, %v1373
    %v1375 = vld [vmem:[#allocation7] sm:$0xff]
    %v1376 = vld [vmem:[#allocation7 + $0x8] sm:$0xff]
    %v1377 = vld [vmem:[#allocation7 + $0x10] sm:$0xff]
    %v1378 = vld [vmem:[#allocation7 + $0x18] sm:$0xff]
    %v1379 = vld [vmem:[%s9] sm:$0xff]
    %v1381 = vunpack.c.l.b16 %v1379
    %v1382 = vunpack.c.h.b16 %v1379
    %v1383 = vpack.c.b16 %v1381, %v1381
    %v1384 = vpack.c.b16 %v1382, %v1382
    %v1386 = vsel %vm307, %v1383, 0
    %v1389 = vsel %vm307, %v1384, 0
    %1391 = vmatpush.bf16.msra.mxu0 0
    %1392 = vmatpush.bf16.msra.mxu0 0
    %1393 = vmatpush.bf16.msra.mxu0 0
    %1394 = vmatpush.bf16.msra.mxu0 0
    %1395 = vmatpush.bf16.msra.mxu0 0
    %1396 = vmatpush.bf16.msra.mxu0 0
    %1397 = vmatpush.bf16.msra.mxu0 0
    %1398 = vmatpush.bf16.msra.mxu0 %v1386
    %1399 = vmatmul.bf16.gmra.mxu0 %v305
    %v1400 = vpop.f32.mrf.mxu0
    %v1401 = vadd.f32 0.0, %v1400
    %v1402 = vpop.f32.mrf.mxu0
    %1403 = vdwg.mxu0
    %1404 = vmatpush.bf16.msra.mxu0 0
    %1405 = vmatpush.bf16.msra.mxu0 0
    %1406 = vmatpush.bf16.msra.mxu0 0
    %1407 = vmatpush.bf16.msra.mxu0 0
    %1408 = vmatpush.bf16.msra.mxu0 0
    %1409 = vmatpush.bf16.msra.mxu0 0
    %1410 = vmatpush.bf16.msra.mxu0 0
    %1411 = vmatpush.bf16.msra.mxu0 %v1389
    %1412 = vmatmul.bf16.gmra.mxu0 %v305
    %v1413 = vpop.f32.mrf.mxu0
    %v1414 = vadd.f32 0.0, %v1413
    %v1415 = vpop.f32.mrf.mxu0
    %1416 = vdwg.mxu0
    %v1421 = vunpack.c.l.b16 %v1375
    %v1422 = vunpack.c.h.b16 %v1375
    %v1423 = vunpack.c.l.b16 %v1376
    %v1424 = vunpack.c.h.b16 %v1376
    %v1425 = vunpack.c.l.b16 %v1377
    %v1426 = vunpack.c.h.b16 %v1377
    %v1427 = vunpack.c.l.b16 %v1378
    %v1428 = vunpack.c.h.b16 %v1378
    %v1429 = vpack.c.b16 %v1423, %v1421
    %v1430 = vpack.c.b16 %v1424, %v1422
    %v1431 = vpack.c.b16 %v1427, %v1425
    %v1432 = vpack.c.b16 %v1428, %v1426
    %vm1437 = vcmask 261120
    %v1439 = vsel %vm1437, %v1374, 0
    %1441 = vmatpush.bf16.msra.mxu0 0
    %1442 = vmatpush.bf16.msra.mxu0 0
    %1443 = vmatpush.bf16.msra.mxu0 0
    %1444 = vmatpush.bf16.msra.mxu0 0
    %1445 = vmatpush.bf16.msra.mxu0 0
    %1446 = vmatpush.bf16.msra.mxu0 0
    %1447 = vmatpush.bf16.msra.mxu0 %v1431
    %1448 = vmatpush.bf16.msra.mxu0 %v1429
    %1449 = vmatmul.bf16.gmra.mxu0 %v1439
    %v1450 = vpop.f32.mrf.mxu0
    %v1451 = vadd.f32 %v1401, %v1450
    %v1452 = vpop.f32.mrf.mxu0
    %1453 = vdwg.mxu0
    %1454 = vmatpush.bf16.msra.mxu0 0
    %1455 = vmatpush.bf16.msra.mxu0 0
    %1456 = vmatpush.bf16.msra.mxu0 0
    %1457 = vmatpush.bf16.msra.mxu0 0
    %1458 = vmatpush.bf16.msra.mxu0 0
    %1459 = vmatpush.bf16.msra.mxu0 0
    %1460 = vmatpush.bf16.msra.mxu0 %v1432
    %1461 = vmatpush.bf16.msra.mxu0 %v1430
    %1462 = vmatmul.bf16.gmra.mxu0 %v1439
    %v1463 = vpop.f32.mrf.mxu0
    %v1464 = vadd.f32 %v1414, %v1463
    %v1465 = vpop.f32.mrf.mxu0
    %1466 = vdwg.mxu0
    %v1467 = vld [vmem:[#allocation8] sm:$0x3]
    %v1468 = vunpack.c.l.bf16 %v1467
    %v1470 = vperm.slane %v1468, 0
    %v1471 = vperm.slane %v1468, 2
    %v1474 = vperm.slane %v1470, 0
    %v1475 = vperm.slane %v1471, 0
    %v1476 = vadd.f32 %v1451, %v1474
    %v1477 = vadd.f32 %v1464, %v1475
    %v1478 = vmax.f32 %v1476, 0.0
    %v1479 = vmax.f32 %v1477, 0.0
    %v1480 = vpack.c.bf16 %v1478, %v1478
    %v1481 = vpack.c.bf16 %v1479, %v1479
    %v1482 = vld [vmem:[#allocation10] sm:$0xff]
    %v1483 = vld [vmem:[#allocation10 + $0x8] sm:$0xff]
    %v1484 = vld [vmem:[#allocation10 + $0x10] sm:$0xff]
    %v1485 = vld [vmem:[#allocation10 + $0x18] sm:$0xff]
    %v1486 = vld [vmem:[#allocation10 + $0x20] sm:$0xff]
    %v1487 = vld [vmem:[#allocation10 + $0x28] sm:$0xff]
    %v1488 = vld [vmem:[#allocation10 + $0x30] sm:$0xff]
    %v1489 = vld [vmem:[#allocation10 + $0x38] sm:$0xff]
    %v1490 = vld [vmem:[#allocation10 + $0x40] sm:$0xff]
    %v1491 = vld [vmem:[#allocation10 + $0x48] sm:$0xff]
    %v1492 = vld [vmem:[#allocation10 + $0x50] sm:$0xff]
    %v1493 = vld [vmem:[#allocation10 + $0x58] sm:$0xff]
    %v1494 = vld [vmem:[#allocation10 + $0x60] sm:$0xff]
    %v1495 = vld [vmem:[#allocation10 + $0x68] sm:$0xff]
    %v1496 = vld [vmem:[#allocation10 + $0x70] sm:$0xff]
    %v1497 = vld [vmem:[#allocation10 + $0x78] sm:$0xff]
    %v1498 = vld [vmem:[#allocation10 + $0x80] sm:$0xff]
    %v1499 = vld [vmem:[#allocation10 + $0x88] sm:$0xff]
    %v1500 = vld [vmem:[#allocation10 + $0x90] sm:$0xff]
    %v1501 = vld [vmem:[#allocation10 + $0x98] sm:$0xff]
    %v1502 = vld [vmem:[#allocation10 + $0xa0] sm:$0xff]
    %v1503 = vld [vmem:[#allocation10 + $0xa8] sm:$0xff]
    %v1504 = vld [vmem:[#allocation10 + $0xb0] sm:$0xff]
    %v1505 = vld [vmem:[#allocation10 + $0xb8] sm:$0xff]
    %v1506 = vld [vmem:[#allocation10 + $0xc0] sm:$0xff]
    %v1507 = vld [vmem:[#allocation10 + $0xc8] sm:$0xff]
    %v1508 = vld [vmem:[#allocation10 + $0xd0] sm:$0xff]
    %v1509 = vld [vmem:[#allocation10 + $0xd8] sm:$0xff]
    %v1510 = vld [vmem:[#allocation10 + $0xe0] sm:$0xff]
    %v1511 = vld [vmem:[#allocation10 + $0xe8] sm:$0xff]
    %v1512 = vld [vmem:[#allocation10 + $0xf0] sm:$0xff]
    %v1513 = vld [vmem:[#allocation10 + $0xf8] sm:$0xff]
    %v1514 = vld [vmem:[#allocation10 + $0x100] sm:$0xff]
    %v1515 = vld [vmem:[#allocation10 + $0x108] sm:$0xff]
    %v1516 = vld [vmem:[#allocation10 + $0x110] sm:$0xff]
    %v1517 = vld [vmem:[#allocation10 + $0x118] sm:$0xff]
    %v1518 = vld [vmem:[#allocation10 + $0x120] sm:$0xff]
    %v1519 = vld [vmem:[#allocation10 + $0x128] sm:$0xff]
    %v1520 = vld [vmem:[#allocation10 + $0x130] sm:$0xff]
    %v1521 = vld [vmem:[#allocation10 + $0x138] sm:$0xff]
    %v1522 = vld [vmem:[#allocation10 + $0x140] sm:$0xff]
    %v1523 = vld [vmem:[#allocation10 + $0x148] sm:$0xff]
    %v1524 = vld [vmem:[#allocation10 + $0x150] sm:$0xff]
    %v1525 = vld [vmem:[#allocation10 + $0x158] sm:$0xff]
    %v1526 = vld [vmem:[#allocation10 + $0x160] sm:$0xff]
    %v1527 = vld [vmem:[#allocation10 + $0x168] sm:$0xff]
    %v1528 = vld [vmem:[#allocation10 + $0x170] sm:$0xff]
    %v1529 = vld [vmem:[#allocation10 + $0x178] sm:$0xff]
    %v1530 = vld [vmem:[#allocation10 + $0x180] sm:$0xff]
    %v1531 = vld [vmem:[#allocation10 + $0x188] sm:$0xff]
    %v1532 = vld [vmem:[#allocation10 + $0x190] sm:$0xff]
    %v1533 = vld [vmem:[#allocation10 + $0x198] sm:$0xff]
    %v1534 = vld [vmem:[#allocation10 + $0x1a0] sm:$0xff]
    %v1535 = vld [vmem:[#allocation10 + $0x1a8] sm:$0xff]
    %v1536 = vld [vmem:[#allocation10 + $0x1b0] sm:$0xff]
    %v1537 = vld [vmem:[#allocation10 + $0x1b8] sm:$0xff]
    %v1538 = vld [vmem:[#allocation10 + $0x1c0] sm:$0xff]
    %v1539 = vld [vmem:[#allocation10 + $0x1c8] sm:$0xff]
    %v1540 = vld [vmem:[#allocation10 + $0x1d0] sm:$0xff]
    %v1541 = vld [vmem:[#allocation10 + $0x1d8] sm:$0xff]
    %v1542 = vld [vmem:[#allocation10 + $0x1e0] sm:$0xff]
    %v1543 = vld [vmem:[#allocation10 + $0x1e8] sm:$0xff]
    %v1544 = vld [vmem:[#allocation10 + $0x1f0] sm:$0xff]
    %v1545 = vld [vmem:[#allocation10 + $0x1f8] sm:$0xff]
    %v1546 = vld [vmem:[#allocation10 + $0x200] sm:$0xff]
    %v1547 = vld [vmem:[#allocation10 + $0x208] sm:$0xff]
    %v1548 = vld [vmem:[#allocation10 + $0x210] sm:$0xff]
    %v1549 = vld [vmem:[#allocation10 + $0x218] sm:$0xff]
    %v1550 = vld [vmem:[#allocation10 + $0x220] sm:$0xff]
    %v1551 = vld [vmem:[#allocation10 + $0x228] sm:$0xff]
    %v1552 = vld [vmem:[#allocation10 + $0x230] sm:$0xff]
    %v1553 = vld [vmem:[#allocation10 + $0x238] sm:$0xff]
    %v1554 = vld [vmem:[#allocation10 + $0x240] sm:$0xff]
    %v1555 = vld [vmem:[#allocation10 + $0x248] sm:$0xff]
    %v1556 = vld [vmem:[#allocation10 + $0x250] sm:$0xff]
    %v1557 = vld [vmem:[#allocation10 + $0x258] sm:$0xff]
    %v1558 = vld [vmem:[#allocation10 + $0x260] sm:$0xff]
    %v1559 = vld [vmem:[#allocation10 + $0x268] sm:$0xff]
    %v1560 = vld [vmem:[#allocation10 + $0x270] sm:$0xff]
    %v1561 = vld [vmem:[#allocation10 + $0x278] sm:$0xff]
    %v1562 = vld [vmem:[#allocation10 + $0x280] sm:$0xff]
    %v1563 = vld [vmem:[#allocation10 + $0x288] sm:$0xff]
    %v1564 = vld [vmem:[#allocation10 + $0x290] sm:$0xff]
    %v1565 = vld [vmem:[#allocation10 + $0x298] sm:$0xff]
    %v1566 = vld [vmem:[#allocation10 + $0x2a0] sm:$0xff]
    %v1567 = vld [vmem:[#allocation10 + $0x2a8] sm:$0xff]
    %v1568 = vld [vmem:[#allocation10 + $0x2b0] sm:$0xff]
    %v1569 = vld [vmem:[#allocation10 + $0x2b8] sm:$0xff]
    %v1570 = vld [vmem:[#allocation10 + $0x2c0] sm:$0xff]
    %v1571 = vld [vmem:[#allocation10 + $0x2c8] sm:$0xff]
    %v1572 = vld [vmem:[#allocation10 + $0x2d0] sm:$0xff]
    %v1573 = vld [vmem:[#allocation10 + $0x2d8] sm:$0xff]
    %v1574 = vld [vmem:[#allocation10 + $0x2e0] sm:$0xff]
    %v1575 = vld [vmem:[#allocation10 + $0x2e8] sm:$0xff]
    %v1576 = vld [vmem:[#allocation10 + $0x2f0] sm:$0xff]
    %v1577 = vld [vmem:[#allocation10 + $0x2f8] sm:$0xff]
    %v1578 = vld [vmem:[#allocation10 + $0x300] sm:$0xff]
    %v1579 = vld [vmem:[#allocation10 + $0x308] sm:$0xff]
    %v1580 = vld [vmem:[#allocation10 + $0x310] sm:$0xff]
    %v1581 = vld [vmem:[#allocation10 + $0x318] sm:$0xff]
    %v1582 = vld [vmem:[#allocation10 + $0x320] sm:$0xff]
    %v1583 = vld [vmem:[#allocation10 + $0x328] sm:$0xff]
    %v1584 = vld [vmem:[#allocation10 + $0x330] sm:$0xff]
    %v1585 = vld [vmem:[#allocation10 + $0x338] sm:$0xff]
    %v1586 = vld [vmem:[#allocation10 + $0x340] sm:$0xff]
    %v1587 = vld [vmem:[#allocation10 + $0x348] sm:$0xff]
    %v1588 = vld [vmem:[#allocation10 + $0x350] sm:$0xff]
    %v1589 = vld [vmem:[#allocation10 + $0x358] sm:$0xff]
    %v1590 = vld [vmem:[#allocation10 + $0x360] sm:$0xff]
    %v1591 = vld [vmem:[#allocation10 + $0x368] sm:$0xff]
    %v1592 = vld [vmem:[#allocation10 + $0x370] sm:$0xff]
    %v1593 = vld [vmem:[#allocation10 + $0x378] sm:$0xff]
    %v1594 = vld [vmem:[#allocation10 + $0x380] sm:$0xff]
    %v1595 = vld [vmem:[#allocation10 + $0x388] sm:$0xff]
    %v1596 = vld [vmem:[#allocation10 + $0x390] sm:$0xff]
    %v1597 = vld [vmem:[#allocation10 + $0x398] sm:$0xff]
    %v1598 = vld [vmem:[#allocation10 + $0x3a0] sm:$0xff]
    %v1599 = vld [vmem:[#allocation10 + $0x3a8] sm:$0xff]
    %v1600 = vld [vmem:[#allocation10 + $0x3b0] sm:$0xff]
    %v1601 = vld [vmem:[#allocation10 + $0x3b8] sm:$0xff]
    %v1602 = vld [vmem:[#allocation10 + $0x3c0] sm:$0xff]
    %v1603 = vld [vmem:[#allocation10 + $0x3c8] sm:$0xff]
    %v1604 = vld [vmem:[#allocation10 + $0x3d0] sm:$0xff]
    %v1605 = vld [vmem:[#allocation10 + $0x3d8] sm:$0xff]
    %v1606 = vld [vmem:[#allocation10 + $0x3e0] sm:$0xff]
    %v1607 = vld [vmem:[#allocation10 + $0x3e8] sm:$0xff]
    %v1608 = vld [vmem:[#allocation10 + $0x3f0] sm:$0xff]
    %v1609 = vld [vmem:[#allocation10 + $0x3f8] sm:$0xff]
    %v1610 = vld [vmem:[#allocation11] sm:$0xff]
    %v1611 = vunpack.c.l.bf16 %v1610
    %v1612 = vunpack.c.h.bf16 %v1610
    %v1615 = vperm.slane %v1611, 0
    %v1616 = vperm.slane %v1611, 2
    %v1617 = vperm.slane %v1611, 4
    %v1618 = vperm.slane %v1611, 6
    %v1619 = vperm.slane %v1612, 0
    %v1620 = vperm.slane %v1612, 2
    %v1621 = vperm.slane %v1612, 4
    %v1622 = vperm.slane %v1612, 6
    %v1631 = vperm.slane %v1615, 0
    %v1632 = vperm.slane %v1616, 0
    %v1633 = vperm.slane %v1617, 0
    %v1634 = vperm.slane %v1618, 0
    %v1635 = vperm.slane %v1619, 0
    %v1636 = vperm.slane %v1620, 0
    %v1637 = vperm.slane %v1621, 0
    %v1638 = vperm.slane %v1622, 0
    %v1767 = vunpack.c.l.b16 %v1482
    %v1768 = vunpack.c.h.b16 %v1482
    %v1769 = vunpack.c.l.b16 %v1483
    %v1770 = vunpack.c.h.b16 %v1483
    %v1771 = vunpack.c.l.b16 %v1484
    %v1772 = vunpack.c.h.b16 %v1484
    %v1773 = vunpack.c.l.b16 %v1485
    %v1774 = vunpack.c.h.b16 %v1485
    %v1775 = vunpack.c.l.b16 %v1486
    %v1776 = vunpack.c.h.b16 %v1486
    %v1777 = vunpack.c.l.b16 %v1487
    %v1778 = vunpack.c.h.b16 %v1487
    %v1779 = vunpack.c.l.b16 %v1488
    %v1780 = vunpack.c.h.b16 %v1488
    %v1781 = vunpack.c.l.b16 %v1489
    %v1782 = vunpack.c.h.b16 %v1489
    %v1783 = vunpack.c.l.b16 %v1490
    %v1784 = vunpack.c.h.b16 %v1490
    %v1785 = vunpack.c.l.b16 %v1491
    %v1786 = vunpack.c.h.b16 %v1491
    %v1787 = vunpack.c.l.b16 %v1492
    %v1788 = vunpack.c.h.b16 %v1492
    %v1789 = vunpack.c.l.b16 %v1493
    %v1790 = vunpack.c.h.b16 %v1493
    %v1791 = vunpack.c.l.b16 %v1494
    %v1792 = vunpack.c.h.b16 %v1494
    %v1793 = vunpack.c.l.b16 %v1495
    %v1794 = vunpack.c.h.b16 %v1495
    %v1795 = vunpack.c.l.b16 %v1496
    %v1796 = vunpack.c.h.b16 %v1496
    %v1797 = vunpack.c.l.b16 %v1497
    %v1798 = vunpack.c.h.b16 %v1497
    %v1799 = vunpack.c.l.b16 %v1498
    %v1800 = vunpack.c.h.b16 %v1498
    %v1801 = vunpack.c.l.b16 %v1499
    %v1802 = vunpack.c.h.b16 %v1499
    %v1803 = vunpack.c.l.b16 %v1500
    %v1804 = vunpack.c.h.b16 %v1500
    %v1805 = vunpack.c.l.b16 %v1501
    %v1806 = vunpack.c.h.b16 %v1501
    %v1807 = vunpack.c.l.b16 %v1502
    %v1808 = vunpack.c.h.b16 %v1502
    %v1809 = vunpack.c.l.b16 %v1503
    %v1810 = vunpack.c.h.b16 %v1503
    %v1811 = vunpack.c.l.b16 %v1504
    %v1812 = vunpack.c.h.b16 %v1504
    %v1813 = vunpack.c.l.b16 %v1505
    %v1814 = vunpack.c.h.b16 %v1505
    %v1815 = vunpack.c.l.b16 %v1506
    %v1816 = vunpack.c.h.b16 %v1506
    %v1817 = vunpack.c.l.b16 %v1507
    %v1818 = vunpack.c.h.b16 %v1507
    %v1819 = vunpack.c.l.b16 %v1508
    %v1820 = vunpack.c.h.b16 %v1508
    %v1821 = vunpack.c.l.b16 %v1509
    %v1822 = vunpack.c.h.b16 %v1509
    %v1823 = vunpack.c.l.b16 %v1510
    %v1824 = vunpack.c.h.b16 %v1510
    %v1825 = vunpack.c.l.b16 %v1511
    %v1826 = vunpack.c.h.b16 %v1511
    %v1827 = vunpack.c.l.b16 %v1512
    %v1828 = vunpack.c.h.b16 %v1512
    %v1829 = vunpack.c.l.b16 %v1513
    %v1830 = vunpack.c.h.b16 %v1513
    %v1831 = vunpack.c.l.b16 %v1514
    %v1832 = vunpack.c.h.b16 %v1514
    %v1833 = vunpack.c.l.b16 %v1515
    %v1834 = vunpack.c.h.b16 %v1515
    %v1835 = vunpack.c.l.b16 %v1516
    %v1836 = vunpack.c.h.b16 %v1516
    %v1837 = vunpack.c.l.b16 %v1517
    %v1838 = vunpack.c.h.b16 %v1517
    %v1839 = vunpack.c.l.b16 %v1518
    %v1840 = vunpack.c.h.b16 %v1518
    %v1841 = vunpack.c.l.b16 %v1519
    %v1842 = vunpack.c.h.b16 %v1519
    %v1843 = vunpack.c.l.b16 %v1520
    %v1844 = vunpack.c.h.b16 %v1520
    %v1845 = vunpack.c.l.b16 %v1521
    %v1846 = vunpack.c.h.b16 %v1521
    %v1847 = vunpack.c.l.b16 %v1522
    %v1848 = vunpack.c.h.b16 %v1522
    %v1849 = vunpack.c.l.b16 %v1523
    %v1850 = vunpack.c.h.b16 %v1523
    %v1851 = vunpack.c.l.b16 %v1524
    %v1852 = vunpack.c.h.b16 %v1524
    %v1853 = vunpack.c.l.b16 %v1525
    %v1854 = vunpack.c.h.b16 %v1525
    %v1855 = vunpack.c.l.b16 %v1526
    %v1856 = vunpack.c.h.b16 %v1526
    %v1857 = vunpack.c.l.b16 %v1527
    %v1858 = vunpack.c.h.b16 %v1527
    %v1859 = vunpack.c.l.b16 %v1528
    %v1860 = vunpack.c.h.b16 %v1528
    %v1861 = vunpack.c.l.b16 %v1529
    %v1862 = vunpack.c.h.b16 %v1529
    %v1863 = vunpack.c.l.b16 %v1530
    %v1864 = vunpack.c.h.b16 %v1530
    %v1865 = vunpack.c.l.b16 %v1531
    %v1866 = vunpack.c.h.b16 %v1531
    %v1867 = vunpack.c.l.b16 %v1532
    %v1868 = vunpack.c.h.b16 %v1532
    %v1869 = vunpack.c.l.b16 %v1533
    %v1870 = vunpack.c.h.b16 %v1533
    %v1871 = vunpack.c.l.b16 %v1534
    %v1872 = vunpack.c.h.b16 %v1534
    %v1873 = vunpack.c.l.b16 %v1535
    %v1874 = vunpack.c.h.b16 %v1535
    %v1875 = vunpack.c.l.b16 %v1536
    %v1876 = vunpack.c.h.b16 %v1536
    %v1877 = vunpack.c.l.b16 %v1537
    %v1878 = vunpack.c.h.b16 %v1537
    %v1879 = vunpack.c.l.b16 %v1538
    %v1880 = vunpack.c.h.b16 %v1538
    %v1881 = vunpack.c.l.b16 %v1539
    %v1882 = vunpack.c.h.b16 %v1539
    %v1883 = vunpack.c.l.b16 %v1540
    %v1884 = vunpack.c.h.b16 %v1540
    %v1885 = vunpack.c.l.b16 %v1541
    %v1886 = vunpack.c.h.b16 %v1541
    %v1887 = vunpack.c.l.b16 %v1542
    %v1888 = vunpack.c.h.b16 %v1542
    %v1889 = vunpack.c.l.b16 %v1543
    %v1890 = vunpack.c.h.b16 %v1543
    %v1891 = vunpack.c.l.b16 %v1544
    %v1892 = vunpack.c.h.b16 %v1544
    %v1893 = vunpack.c.l.b16 %v1545
    %v1894 = vunpack.c.h.b16 %v1545
    %v1895 = vunpack.c.l.b16 %v1546
    %v1896 = vunpack.c.h.b16 %v1546
    %v1897 = vunpack.c.l.b16 %v1547
    %v1898 = vunpack.c.h.b16 %v1547
    %v1899 = vunpack.c.l.b16 %v1548
    %v1900 = vunpack.c.h.b16 %v1548
    %v1901 = vunpack.c.l.b16 %v1549
    %v1902 = vunpack.c.h.b16 %v1549
    %v1903 = vunpack.c.l.b16 %v1550
    %v1904 = vunpack.c.h.b16 %v1550
    %v1905 = vunpack.c.l.b16 %v1551
    %v1906 = vunpack.c.h.b16 %v1551
    %v1907 = vunpack.c.l.b16 %v1552
    %v1908 = vunpack.c.h.b16 %v1552
    %v1909 = vunpack.c.l.b16 %v1553
    %v1910 = vunpack.c.h.b16 %v1553
    %v1911 = vunpack.c.l.b16 %v1554
    %v1912 = vunpack.c.h.b16 %v1554
    %v1913 = vunpack.c.l.b16 %v1555
    %v1914 = vunpack.c.h.b16 %v1555
    %v1915 = vunpack.c.l.b16 %v1556
    %v1916 = vunpack.c.h.b16 %v1556
    %v1917 = vunpack.c.l.b16 %v1557
    %v1918 = vunpack.c.h.b16 %v1557
    %v1919 = vunpack.c.l.b16 %v1558
    %v1920 = vunpack.c.h.b16 %v1558
    %v1921 = vunpack.c.l.b16 %v1559
    %v1922 = vunpack.c.h.b16 %v1559
    %v1923 = vunpack.c.l.b16 %v1560
    %v1924 = vunpack.c.h.b16 %v1560
    %v1925 = vunpack.c.l.b16 %v1561
    %v1926 = vunpack.c.h.b16 %v1561
    %v1927 = vunpack.c.l.b16 %v1562
    %v1928 = vunpack.c.h.b16 %v1562
    %v1929 = vunpack.c.l.b16 %v1563
    %v1930 = vunpack.c.h.b16 %v1563
    %v1931 = vunpack.c.l.b16 %v1564
    %v1932 = vunpack.c.h.b16 %v1564
    %v1933 = vunpack.c.l.b16 %v1565
    %v1934 = vunpack.c.h.b16 %v1565
    %v1935 = vunpack.c.l.b16 %v1566
    %v1936 = vunpack.c.h.b16 %v1566
    %v1937 = vunpack.c.l.b16 %v1567
    %v1938 = vunpack.c.h.b16 %v1567
    %v1939 = vunpack.c.l.b16 %v1568
    %v1940 = vunpack.c.h.b16 %v1568
    %v1941 = vunpack.c.l.b16 %v1569
    %v1942 = vunpack.c.h.b16 %v1569
    %v1943 = vunpack.c.l.b16 %v1570
    %v1944 = vunpack.c.h.b16 %v1570
    %v1945 = vunpack.c.l.b16 %v1571
    %v1946 = vunpack.c.h.b16 %v1571
    %v1947 = vunpack.c.l.b16 %v1572
    %v1948 = vunpack.c.h.b16 %v1572
    %v1949 = vunpack.c.l.b16 %v1573
    %v1950 = vunpack.c.h.b16 %v1573
    %v1951 = vunpack.c.l.b16 %v1574
    %v1952 = vunpack.c.h.b16 %v1574
    %v1953 = vunpack.c.l.b16 %v1575
    %v1954 = vunpack.c.h.b16 %v1575
    %v1955 = vunpack.c.l.b16 %v1576
    %v1956 = vunpack.c.h.b16 %v1576
    %v1957 = vunpack.c.l.b16 %v1577
    %v1958 = vunpack.c.h.b16 %v1577
    %v1959 = vunpack.c.l.b16 %v1578
    %v1960 = vunpack.c.h.b16 %v1578
    %v1961 = vunpack.c.l.b16 %v1579
    %v1962 = vunpack.c.h.b16 %v1579
    %v1963 = vunpack.c.l.b16 %v1580
    %v1964 = vunpack.c.h.b16 %v1580
    %v1965 = vunpack.c.l.b16 %v1581
    %v1966 = vunpack.c.h.b16 %v1581
    %v1967 = vunpack.c.l.b16 %v1582
    %v1968 = vunpack.c.h.b16 %v1582
    %v1969 = vunpack.c.l.b16 %v1583
    %v1970 = vunpack.c.h.b16 %v1583
    %v1971 = vunpack.c.l.b16 %v1584
    %v1972 = vunpack.c.h.b16 %v1584
    %v1973 = vunpack.c.l.b16 %v1585
    %v1974 = vunpack.c.h.b16 %v1585
    %v1975 = vunpack.c.l.b16 %v1586
    %v1976 = vunpack.c.h.b16 %v1586
    %v1977 = vunpack.c.l.b16 %v1587
    %v1978 = vunpack.c.h.b16 %v1587
    %v1979 = vunpack.c.l.b16 %v1588
    %v1980 = vunpack.c.h.b16 %v1588
    %v1981 = vunpack.c.l.b16 %v1589
    %v1982 = vunpack.c.h.b16 %v1589
    %v1983 = vunpack.c.l.b16 %v1590
    %v1984 = vunpack.c.h.b16 %v1590
    %v1985 = vunpack.c.l.b16 %v1591
    %v1986 = vunpack.c.h.b16 %v1591
    %v1987 = vunpack.c.l.b16 %v1592
    %v1988 = vunpack.c.h.b16 %v1592
    %v1989 = vunpack.c.l.b16 %v1593
    %v1990 = vunpack.c.h.b16 %v1593
    %v1991 = vunpack.c.l.b16 %v1594
    %v1992 = vunpack.c.h.b16 %v1594
    %v1993 = vunpack.c.l.b16 %v1595
    %v1994 = vunpack.c.h.b16 %v1595
    %v1995 = vunpack.c.l.b16 %v1596
    %v1996 = vunpack.c.h.b16 %v1596
    %v1997 = vunpack.c.l.b16 %v1597
    %v1998 = vunpack.c.h.b16 %v1597
    %v1999 = vunpack.c.l.b16 %v1598
    %v2000 = vunpack.c.h.b16 %v1598
    %v2001 = vunpack.c.l.b16 %v1599
    %v2002 = vunpack.c.h.b16 %v1599
    %v2003 = vunpack.c.l.b16 %v1600
    %v2004 = vunpack.c.h.b16 %v1600
    %v2005 = vunpack.c.l.b16 %v1601
    %v2006 = vunpack.c.h.b16 %v1601
    %v2007 = vunpack.c.l.b16 %v1602
    %v2008 = vunpack.c.h.b16 %v1602
    %v2009 = vunpack.c.l.b16 %v1603
    %v2010 = vunpack.c.h.b16 %v1603
    %v2011 = vunpack.c.l.b16 %v1604
    %v2012 = vunpack.c.h.b16 %v1604
    %v2013 = vunpack.c.l.b16 %v1605
    %v2014 = vunpack.c.h.b16 %v1605
    %v2015 = vunpack.c.l.b16 %v1606
    %v2016 = vunpack.c.h.b16 %v1606
    %v2017 = vunpack.c.l.b16 %v1607
    %v2018 = vunpack.c.h.b16 %v1607
    %v2019 = vunpack.c.l.b16 %v1608
    %v2020 = vunpack.c.h.b16 %v1608
    %v2021 = vunpack.c.l.b16 %v1609
    %v2022 = vunpack.c.h.b16 %v1609
    %v2023 = vpack.c.b16 %v1775, %v1767
    %v2024 = vpack.c.b16 %v1776, %v1768
    %v2025 = vpack.c.b16 %v1777, %v1769
    %v2026 = vpack.c.b16 %v1778, %v1770
    %v2027 = vpack.c.b16 %v1779, %v1771
    %v2028 = vpack.c.b16 %v1780, %v1772
    %v2029 = vpack.c.b16 %v1781, %v1773
    %v2030 = vpack.c.b16 %v1782, %v1774
    %v2031 = vpack.c.b16 %v1791, %v1783
    %v2032 = vpack.c.b16 %v1792, %v1784
    %v2033 = vpack.c.b16 %v1793, %v1785
    %v2034 = vpack.c.b16 %v1794, %v1786
    %v2035 = vpack.c.b16 %v1795, %v1787
    %v2036 = vpack.c.b16 %v1796, %v1788
    %v2037 = vpack.c.b16 %v1797, %v1789
    %v2038 = vpack.c.b16 %v1798, %v1790
    %v2039 = vpack.c.b16 %v1807, %v1799
    %v2040 = vpack.c.b16 %v1808, %v1800
    %v2041 = vpack.c.b16 %v1809, %v1801
    %v2042 = vpack.c.b16 %v1810, %v1802
    %v2043 = vpack.c.b16 %v1811, %v1803
    %v2044 = vpack.c.b16 %v1812, %v1804
    %v2045 = vpack.c.b16 %v1813, %v1805
    %v2046 = vpack.c.b16 %v1814, %v1806
    %v2047 = vpack.c.b16 %v1823, %v1815
    %v2048 = vpack.c.b16 %v1824, %v1816
    %v2049 = vpack.c.b16 %v1825, %v1817
    %v2050 = vpack.c.b16 %v1826, %v1818
    %v2051 = vpack.c.b16 %v1827, %v1819
    %v2052 = vpack.c.b16 %v1828, %v1820
    %v2053 = vpack.c.b16 %v1829, %v1821
    %v2054 = vpack.c.b16 %v1830, %v1822
    %v2055 = vpack.c.b16 %v1839, %v1831
    %v2056 = vpack.c.b16 %v1840, %v1832
    %v2057 = vpack.c.b16 %v1841, %v1833
    %v2058 = vpack.c.b16 %v1842, %v1834
    %v2059 = vpack.c.b16 %v1843, %v1835
    %v2060 = vpack.c.b16 %v1844, %v1836
    %v2061 = vpack.c.b16 %v1845, %v1837
    %v2062 = vpack.c.b16 %v1846, %v1838
    %v2063 = vpack.c.b16 %v1855, %v1847
    %v2064 = vpack.c.b16 %v1856, %v1848
    %v2065 = vpack.c.b16 %v1857, %v1849
    %v2066 = vpack.c.b16 %v1858, %v1850
    %v2067 = vpack.c.b16 %v1859, %v1851
    %v2068 = vpack.c.b16 %v1860, %v1852
    %v2069 = vpack.c.b16 %v1861, %v1853
    %v2070 = vpack.c.b16 %v1862, %v1854
    %v2071 = vpack.c.b16 %v1871, %v1863
    %v2072 = vpack.c.b16 %v1872, %v1864
    %v2073 = vpack.c.b16 %v1873, %v1865
    %v2074 = vpack.c.b16 %v1874, %v1866
    %v2075 = vpack.c.b16 %v1875, %v1867
    %v2076 = vpack.c.b16 %v1876, %v1868
    %v2077 = vpack.c.b16 %v1877, %v1869
    %v2078 = vpack.c.b16 %v1878, %v1870
    %v2079 = vpack.c.b16 %v1887, %v1879
    %v2080 = vpack.c.b16 %v1888, %v1880
    %v2081 = vpack.c.b16 %v1889, %v1881
    %v2082 = vpack.c.b16 %v1890, %v1882
    %v2083 = vpack.c.b16 %v1891, %v1883
    %v2084 = vpack.c.b16 %v1892, %v1884
    %v2085 = vpack.c.b16 %v1893, %v1885
    %v2086 = vpack.c.b16 %v1894, %v1886
    %v2087 = vpack.c.b16 %v1903, %v1895
    %v2088 = vpack.c.b16 %v1904, %v1896
    %v2089 = vpack.c.b16 %v1905, %v1897
    %v2090 = vpack.c.b16 %v1906, %v1898
    %v2091 = vpack.c.b16 %v1907, %v1899
    %v2092 = vpack.c.b16 %v1908, %v1900
    %v2093 = vpack.c.b16 %v1909, %v1901
    %v2094 = vpack.c.b16 %v1910, %v1902
    %v2095 = vpack.c.b16 %v1919, %v1911
    %v2096 = vpack.c.b16 %v1920, %v1912
    %v2097 = vpack.c.b16 %v1921, %v1913
    %v2098 = vpack.c.b16 %v1922, %v1914
    %v2099 = vpack.c.b16 %v1923, %v1915
    %v2100 = vpack.c.b16 %v1924, %v1916
    %v2101 = vpack.c.b16 %v1925, %v1917
    %v2102 = vpack.c.b16 %v1926, %v1918
    %v2103 = vpack.c.b16 %v1935, %v1927
    %v2104 = vpack.c.b16 %v1936, %v1928
    %v2105 = vpack.c.b16 %v1937, %v1929
    %v2106 = vpack.c.b16 %v1938, %v1930
    %v2107 = vpack.c.b16 %v1939, %v1931
    %v2108 = vpack.c.b16 %v1940, %v1932
    %v2109 = vpack.c.b16 %v1941, %v1933
    %v2110 = vpack.c.b16 %v1942, %v1934
    %v2111 = vpack.c.b16 %v1951, %v1943
    %v2112 = vpack.c.b16 %v1952, %v1944
    %v2113 = vpack.c.b16 %v1953, %v1945
    %v2114 = vpack.c.b16 %v1954, %v1946
    %v2115 = vpack.c.b16 %v1955, %v1947
    %v2116 = vpack.c.b16 %v1956, %v1948
    %v2117 = vpack.c.b16 %v1957, %v1949
    %v2118 = vpack.c.b16 %v1958, %v1950
    %v2119 = vpack.c.b16 %v1967, %v1959
    %v2120 = vpack.c.b16 %v1968, %v1960
    %v2121 = vpack.c.b16 %v1969, %v1961
    %v2122 = vpack.c.b16 %v1970, %v1962
    %v2123 = vpack.c.b16 %v1971, %v1963
    %v2124 = vpack.c.b16 %v1972, %v1964
    %v2125 = vpack.c.b16 %v1973, %v1965
    %v2126 = vpack.c.b16 %v1974, %v1966
    %v2127 = vpack.c.b16 %v1983, %v1975
    %v2128 = vpack.c.b16 %v1984, %v1976
    %v2129 = vpack.c.b16 %v1985, %v1977
    %v2130 = vpack.c.b16 %v1986, %v1978
    %v2131 = vpack.c.b16 %v1987, %v1979
    %v2132 = vpack.c.b16 %v1988, %v1980
    %v2133 = vpack.c.b16 %v1989, %v1981
    %v2134 = vpack.c.b16 %v1990, %v1982
    %v2135 = vpack.c.b16 %v1999, %v1991
    %v2136 = vpack.c.b16 %v2000, %v1992
    %v2137 = vpack.c.b16 %v2001, %v1993
    %v2138 = vpack.c.b16 %v2002, %v1994
    %v2139 = vpack.c.b16 %v2003, %v1995
    %v2140 = vpack.c.b16 %v2004, %v1996
    %v2141 = vpack.c.b16 %v2005, %v1997
    %v2142 = vpack.c.b16 %v2006, %v1998
    %v2143 = vpack.c.b16 %v2015, %v2007
    %v2144 = vpack.c.b16 %v2016, %v2008
    %v2145 = vpack.c.b16 %v2017, %v2009
    %v2146 = vpack.c.b16 %v2018, %v2010
    %v2147 = vpack.c.b16 %v2019, %v2011
    %v2148 = vpack.c.b16 %v2020, %v2012
    %v2149 = vpack.c.b16 %v2021, %v2013
    %v2150 = vpack.c.b16 %v2022, %v2014
    %2279 = vmatpush.bf16.msra.mxu0 %v2079
    %2280 = vmatpush.bf16.msra.mxu0 %v2071
    %2281 = vmatpush.bf16.msra.mxu0 %v2063
    %2282 = vmatpush.bf16.msra.mxu0 %v2055
    %2283 = vmatpush.bf16.msra.mxu0 %v2047
    %2284 = vmatpush.bf16.msra.mxu0 %v2039
    %2285 = vmatpush.bf16.msra.mxu0 %v2031
    %2286 = vmatpush.bf16.msra.mxu0 %v2023
    %2287 = vmatmul.bf16.gmra.mxu0 %v1480
    %v2288 = vpop.f32.mrf.mxu0
    %v2289 = vadd.f32 %v1631, %v2288
    %v2290 = vpop.f32.mrf.mxu0
    %2291 = vdwg.mxu0
    %2292 = vmatpush.bf16.msra.mxu0 %v2143
    %2293 = vmatpush.bf16.msra.mxu0 %v2135
    %2294 = vmatpush.bf16.msra.mxu0 %v2127
    %2295 = vmatpush.bf16.msra.mxu0 %v2119
    %2296 = vmatpush.bf16.msra.mxu0 %v2111
    %2297 = vmatpush.bf16.msra.mxu0 %v2103
    %2298 = vmatpush.bf16.msra.mxu0 %v2095
    %2299 = vmatpush.bf16.msra.mxu0 %v2087
    %2300 = vmatmul.bf16.gmra.mxu0 %v1481
    %v2301 = vpop.f32.mrf.mxu0
    %v2302 = vadd.f32 %v2289, %v2301
    %v2303 = vpop.f32.mrf.mxu0
    %2304 = vdwg.mxu0
    %2305 = vmatpush.bf16.msra.mxu0 %v2080
    %2306 = vmatpush.bf16.msra.mxu0 %v2072
    %2307 = vmatpush.bf16.msra.mxu0 %v2064
    %2308 = vmatpush.bf16.msra.mxu0 %v2056
    %2309 = vmatpush.bf16.msra.mxu0 %v2048
    %2310 = vmatpush.bf16.msra.mxu0 %v2040
    %2311 = vmatpush.bf16.msra.mxu0 %v2032
    %2312 = vmatpush.bf16.msra.mxu0 %v2024
    %2313 = vmatmul.bf16.gmra.mxu0 %v1480
    %v2314 = vpop.f32.mrf.mxu0
    %v2315 = vadd.f32 %v1632, %v2314
    %v2316 = vpop.f32.mrf.mxu0
    %2317 = vdwg.mxu0
    %2318 = vmatpush.bf16.msra.mxu0 %v2144
    %2319 = vmatpush.bf16.msra.mxu0 %v2136
    %2320 = vmatpush.bf16.msra.mxu0 %v2128
    %2321 = vmatpush.bf16.msra.mxu0 %v2120
    %2322 = vmatpush.bf16.msra.mxu0 %v2112
    %2323 = vmatpush.bf16.msra.mxu0 %v2104
    %2324 = vmatpush.bf16.msra.mxu0 %v2096
    %2325 = vmatpush.bf16.msra.mxu0 %v2088
    %2326 = vmatmul.bf16.gmra.mxu0 %v1481
    %v2327 = vpop.f32.mrf.mxu0
    %v2328 = vadd.f32 %v2315, %v2327
    %v2329 = vpop.f32.mrf.mxu0
    %2330 = vdwg.mxu0
    %2331 = vmatpush.bf16.msra.mxu0 %v2081
    %2332 = vmatpush.bf16.msra.mxu0 %v2073
    %2333 = vmatpush.bf16.msra.mxu0 %v2065
    %2334 = vmatpush.bf16.msra.mxu0 %v2057
    %2335 = vmatpush.bf16.msra.mxu0 %v2049
    %2336 = vmatpush.bf16.msra.mxu0 %v2041
    %2337 = vmatpush.bf16.msra.mxu0 %v2033
    %2338 = vmatpush.bf16.msra.mxu0 %v2025
    %2339 = vmatmul.bf16.gmra.mxu0 %v1480
    %v2340 = vpop.f32.mrf.mxu0
    %v2341 = vadd.f32 %v1633, %v2340
    %v2342 = vpop.f32.mrf.mxu0
    %2343 = vdwg.mxu0
    %2344 = vmatpush.bf16.msra.mxu0 %v2145
    %2345 = vmatpush.bf16.msra.mxu0 %v2137
    %2346 = vmatpush.bf16.msra.mxu0 %v2129
    %2347 = vmatpush.bf16.msra.mxu0 %v2121
    %2348 = vmatpush.bf16.msra.mxu0 %v2113
    %2349 = vmatpush.bf16.msra.mxu0 %v2105
    %2350 = vmatpush.bf16.msra.mxu0 %v2097
    %2351 = vmatpush.bf16.msra.mxu0 %v2089
    %2352 = vmatmul.bf16.gmra.mxu0 %v1481
    %v2353 = vpop.f32.mrf.mxu0
    %v2354 = vadd.f32 %v2341, %v2353
    %v2355 = vpop.f32.mrf.mxu0
    %2356 = vdwg.mxu0
    %2357 = vmatpush.bf16.msra.mxu0 %v2082
    %2358 = vmatpush.bf16.msra.mxu0 %v2074
    %2359 = vmatpush.bf16.msra.mxu0 %v2066
    %2360 = vmatpush.bf16.msra.mxu0 %v2058
    %2361 = vmatpush.bf16.msra.mxu0 %v2050
    %2362 = vmatpush.bf16.msra.mxu0 %v2042
    %2363 = vmatpush.bf16.msra.mxu0 %v2034
    %2364 = vmatpush.bf16.msra.mxu0 %v2026
    %2365 = vmatmul.bf16.gmra.mxu0 %v1480
    %v2366 = vpop.f32.mrf.mxu0
    %v2367 = vadd.f32 %v1634, %v2366
    %v2368 = vpop.f32.mrf.mxu0
    %2369 = vdwg.mxu0
    %2370 = vmatpush.bf16.msra.mxu0 %v2146
    %2371 = vmatpush.bf16.msra.mxu0 %v2138
    %2372 = vmatpush.bf16.msra.mxu0 %v2130
    %2373 = vmatpush.bf16.msra.mxu0 %v2122
    %2374 = vmatpush.bf16.msra.mxu0 %v2114
    %2375 = vmatpush.bf16.msra.mxu0 %v2106
    %2376 = vmatpush.bf16.msra.mxu0 %v2098
    %2377 = vmatpush.bf16.msra.mxu0 %v2090
    %2378 = vmatmul.bf16.gmra.mxu0 %v1481
    %v2379 = vpop.f32.mrf.mxu0
    %v2380 = vadd.f32 %v2367, %v2379
    %v2381 = vpop.f32.mrf.mxu0
    %2382 = vdwg.mxu0
    %2383 = vmatpush.bf16.msra.mxu0 %v2083
    %2384 = vmatpush.bf16.msra.mxu0 %v2075
    %2385 = vmatpush.bf16.msra.mxu0 %v2067
    %2386 = vmatpush.bf16.msra.mxu0 %v2059
    %2387 = vmatpush.bf16.msra.mxu0 %v2051
    %2388 = vmatpush.bf16.msra.mxu0 %v2043
    %2389 = vmatpush.bf16.msra.mxu0 %v2035
    %2390 = vmatpush.bf16.msra.mxu0 %v2027
    %2391 = vmatmul.bf16.gmra.mxu0 %v1480
    %v2392 = vpop.f32.mrf.mxu0
    %v2393 = vadd.f32 %v1635, %v2392
    %v2394 = vpop.f32.mrf.mxu0
    %2395 = vdwg.mxu0
    %2396 = vmatpush.bf16.msra.mxu0 %v2147
    %2397 = vmatpush.bf16.msra.mxu0 %v2139
    %2398 = vmatpush.bf16.msra.mxu0 %v2131
    %2399 = vmatpush.bf16.msra.mxu0 %v2123
    %2400 = vmatpush.bf16.msra.mxu0 %v2115
    %2401 = vmatpush.bf16.msra.mxu0 %v2107
    %2402 = vmatpush.bf16.msra.mxu0 %v2099
    %2403 = vmatpush.bf16.msra.mxu0 %v2091
    %2404 = vmatmul.bf16.gmra.mxu0 %v1481
    %v2405 = vpop.f32.mrf.mxu0
    %v2406 = vadd.f32 %v2393, %v2405
    %v2407 = vpop.f32.mrf.mxu0
    %2408 = vdwg.mxu0
    %2409 = vmatpush.bf16.msra.mxu0 %v2084
    %2410 = vmatpush.bf16.msra.mxu0 %v2076
    %2411 = vmatpush.bf16.msra.mxu0 %v2068
    %2412 = vmatpush.bf16.msra.mxu0 %v2060
    %2413 = vmatpush.bf16.msra.mxu0 %v2052
    %2414 = vmatpush.bf16.msra.mxu0 %v2044
    %2415 = vmatpush.bf16.msra.mxu0 %v2036
    %2416 = vmatpush.bf16.msra.mxu0 %v2028
    %2417 = vmatmul.bf16.gmra.mxu0 %v1480
    %v2418 = vpop.f32.mrf.mxu0
    %v2419 = vadd.f32 %v1636, %v2418
    %v2420 = vpop.f32.mrf.mxu0
    %2421 = vdwg.mxu0
    %2422 = vmatpush.bf16.msra.mxu0 %v2148
    %2423 = vmatpush.bf16.msra.mxu0 %v2140
    %2424 = vmatpush.bf16.msra.mxu0 %v2132
    %2425 = vmatpush.bf16.msra.mxu0 %v2124
    %2426 = vmatpush.bf16.msra.mxu0 %v2116
    %2427 = vmatpush.bf16.msra.mxu0 %v2108
    %2428 = vmatpush.bf16.msra.mxu0 %v2100
    %2429 = vmatpush.bf16.msra.mxu0 %v2092
    %2430 = vmatmul.bf16.gmra.mxu0 %v1481
    %v2431 = vpop.f32.mrf.mxu0
    %v2432 = vadd.f32 %v2419, %v2431
    %v2433 = vpop.f32.mrf.mxu0
    %2434 = vdwg.mxu0
    %2435 = vmatpush.bf16.msra.mxu0 %v2085
    %2436 = vmatpush.bf16.msra.mxu0 %v2077
    %2437 = vmatpush.bf16.msra.mxu0 %v2069
    %2438 = vmatpush.bf16.msra.mxu0 %v2061
    %2439 = vmatpush.bf16.msra.mxu0 %v2053
    %2440 = vmatpush.bf16.msra.mxu0 %v2045
    %2441 = vmatpush.bf16.msra.mxu0 %v2037
    %2442 = vmatpush.bf16.msra.mxu0 %v2029
    %2443 = vmatmul.bf16.gmra.mxu0 %v1480
    %v2444 = vpop.f32.mrf.mxu0
    %v2445 = vadd.f32 %v1637, %v2444
    %v2446 = vpop.f32.mrf.mxu0
    %2447 = vdwg.mxu0
    %2448 = vmatpush.bf16.msra.mxu0 %v2149
    %2449 = vmatpush.bf16.msra.mxu0 %v2141
    %2450 = vmatpush.bf16.msra.mxu0 %v2133
    %2451 = vmatpush.bf16.msra.mxu0 %v2125
    %2452 = vmatpush.bf16.msra.mxu0 %v2117
    %2453 = vmatpush.bf16.msra.mxu0 %v2109
    %2454 = vmatpush.bf16.msra.mxu0 %v2101
    %2455 = vmatpush.bf16.msra.mxu0 %v2093
    %2456 = vmatmul.bf16.gmra.mxu0 %v1481
    %v2457 = vpop.f32.mrf.mxu0
    %v2458 = vadd.f32 %v2445, %v2457
    %v2459 = vpop.f32.mrf.mxu0
    %2460 = vdwg.mxu0
    %2461 = vmatpush.bf16.msra.mxu0 %v2086
    %2462 = vmatpush.bf16.msra.mxu0 %v2078
    %2463 = vmatpush.bf16.msra.mxu0 %v2070
    %2464 = vmatpush.bf16.msra.mxu0 %v2062
    %2465 = vmatpush.bf16.msra.mxu0 %v2054
    %2466 = vmatpush.bf16.msra.mxu0 %v2046
    %2467 = vmatpush.bf16.msra.mxu0 %v2038
    %2468 = vmatpush.bf16.msra.mxu0 %v2030
    %2469 = vmatmul.bf16.gmra.mxu0 %v1480
    %v2470 = vpop.f32.mrf.mxu0
    %v2471 = vadd.f32 %v1638, %v2470
    %v2472 = vpop.f32.mrf.mxu0
    %2473 = vdwg.mxu0
    %2474 = vmatpush.bf16.msra.mxu0 %v2150
    %2475 = vmatpush.bf16.msra.mxu0 %v2142
    %2476 = vmatpush.bf16.msra.mxu0 %v2134
    %2477 = vmatpush.bf16.msra.mxu0 %v2126
    %2478 = vmatpush.bf16.msra.mxu0 %v2118
    %2479 = vmatpush.bf16.msra.mxu0 %v2110
    %2480 = vmatpush.bf16.msra.mxu0 %v2102
    %2481 = vmatpush.bf16.msra.mxu0 %v2094
    %2482 = vmatmul.bf16.gmra.mxu0 %v1481
    %v2483 = vpop.f32.mrf.mxu0
    %v2484 = vadd.f32 %v2471, %v2483
    %v2485 = vpop.f32.mrf.mxu0
    %2486 = vdwg.mxu0
    %2487 = vst [vmem:[%s13] sm:$0x3] %v1357
    %2489 = vrot.lane.b32.xlu0 %v1373, 64
    %v2490 = vpop.permute.xlu0 %2489
    %vm2492 = vcmask 779776
    %2493 = vst.msk [vmem:[%s13] sm:$0x3] %vm2492, %v2490
    %v2494 = vxor.u32 %v2302, 2147483648
    %v2495 = vxor.u32 %v2328, 2147483648
    %v2496 = vxor.u32 %v2354, 2147483648
    %v2497 = vxor.u32 %v2380, 2147483648
    %v2498 = vxor.u32 %v2406, 2147483648
    %v2499 = vxor.u32 %v2432, 2147483648
    %v2500 = vxor.u32 %v2458, 2147483648
    %v2501 = vxor.u32 %v2484, 2147483648
    %v2502 = vmul.f32 %v2494, 1.442695
    %v2503 = vpow.pop %v2502
    %v2504 = vmul.f32 %v2495, 1.442695
    %v2505 = vpow.pop %v2504
    %v2506 = vmul.f32 %v2496, 1.442695
    %v2507 = vpow.pop %v2506
    %v2508 = vmul.f32 %v2497, 1.442695
    %v2509 = vpow.pop %v2508
    %v2510 = vmul.f32 %v2498, 1.442695
    %v2511 = vpow.pop %v2510
    %v2512 = vmul.f32 %v2499, 1.442695
    %v2513 = vpow.pop %v2512
    %v2514 = vmul.f32 %v2500, 1.442695
    %v2515 = vpow.pop %v2514
    %v2516 = vmul.f32 %v2501, 1.442695
    %v2517 = vpow.pop %v2516
    %v2518 = vadd.f32 %v2503, 1.0
    %v2519 = vadd.f32 %v2505, 1.0
    %v2520 = vadd.f32 %v2507, 1.0
    %v2521 = vadd.f32 %v2509, 1.0
    %v2522 = vadd.f32 %v2511, 1.0
    %v2523 = vadd.f32 %v2513, 1.0
    %v2524 = vadd.f32 %v2515, 1.0
    %v2525 = vadd.f32 %v2517, 1.0
    %v2526 = vrcp.pop %v2518
    %v2527 = vmul.f32 %v2518, %v2526
    %v2528 = vsub.f32 1.0, %v2527
    %v2529 = vmul.f32 %v2526, %v2528
    %v2530 = vadd.f32 %v2526, %v2529
    %vm2531 = vweird.f32 %v2518
    %vm2532 = vweird.f32 %v2526
    %vm2533 = vmor %vm2531, %vm2532
    %v2534 = vsel %vm2533, %v2526, %v2530
    %v2535 = vand.u32 2147483647, %v2518
    %vm2536 = vcmp.eq.f32.partialorder %v2535, 8.507059e+37
    %v2537 = vand.u32 %v2518, 2147483648
    %v2538 = vor.u32 1.1754944e-38, %v2537
    %v2539 = vsel %vm2536, %v2538, %v2534
    %v2540 = vmul.f32 1.0, %v2539
    %v2541 = vrcp.pop %v2519
    %v2542 = vmul.f32 %v2519, %v2541
    %v2543 = vsub.f32 1.0, %v2542
    %v2544 = vmul.f32 %v2541, %v2543
    %v2545 = vadd.f32 %v2541, %v2544
    %vm2546 = vweird.f32 %v2519
    %vm2547 = vweird.f32 %v2541
    %vm2548 = vmor %vm2546, %vm2547
    %v2549 = vsel %vm2548, %v2541, %v2545
    %v2550 = vand.u32 2147483647, %v2519
    %vm2551 = vcmp.eq.f32.partialorder %v2550, 8.507059e+37
    %v2552 = vand.u32 %v2519, 2147483648
    %v2553 = vor.u32 1.1754944e-38, %v2552
    %v2554 = vsel %vm2551, %v2553, %v2549
    %v2555 = vmul.f32 1.0, %v2554
    %v2556 = vrcp.pop %v2520
    %v2557 = vmul.f32 %v2520, %v2556
    %v2558 = vsub.f32 1.0, %v2557
    %v2559 = vmul.f32 %v2556, %v2558
    %v2560 = vadd.f32 %v2556, %v2559
    %vm2561 = vweird.f32 %v2520
    %vm2562 = vweird.f32 %v2556
    %vm2563 = vmor %vm2561, %vm2562
    %v2564 = vsel %vm2563, %v2556, %v2560
    %v2565 = vand.u32 2147483647, %v2520
    %vm2566 = vcmp.eq.f32.partialorder %v2565, 8.507059e+37
    %v2567 = vand.u32 %v2520, 2147483648
    %v2568 = vor.u32 1.1754944e-38, %v2567
    %v2569 = vsel %vm2566, %v2568, %v2564
    %v2570 = vmul.f32 1.0, %v2569
    %v2571 = vrcp.pop %v2521
    %v2572 = vmul.f32 %v2521, %v2571
    %v2573 = vsub.f32 1.0, %v2572
    %v2574 = vmul.f32 %v2571, %v2573
    %v2575 = vadd.f32 %v2571, %v2574
    %vm2576 = vweird.f32 %v2521
    %vm2577 = vweird.f32 %v2571
    %vm2578 = vmor %vm2576, %vm2577
    %v2579 = vsel %vm2578, %v2571, %v2575
    %v2580 = vand.u32 2147483647, %v2521
    %vm2581 = vcmp.eq.f32.partialorder %v2580, 8.507059e+37
    %v2582 = vand.u32 %v2521, 2147483648
    %v2583 = vor.u32 1.1754944e-38, %v2582
    %v2584 = vsel %vm2581, %v2583, %v2579
    %v2585 = vmul.f32 1.0, %v2584
    %v2586 = vrcp.pop %v2522
    %v2587 = vmul.f32 %v2522, %v2586
    %v2588 = vsub.f32 1.0, %v2587
    %v2589 = vmul.f32 %v2586, %v2588
    %v2590 = vadd.f32 %v2586, %v2589
    %vm2591 = vweird.f32 %v2522
    %vm2592 = vweird.f32 %v2586
    %vm2593 = vmor %vm2591, %vm2592
    %v2594 = vsel %vm2593, %v2586, %v2590
    %v2595 = vand.u32 2147483647, %v2522
    %vm2596 = vcmp.eq.f32.partialorder %v2595, 8.507059e+37
    %v2597 = vand.u32 %v2522, 2147483648
    %v2598 = vor.u32 1.1754944e-38, %v2597
    %v2599 = vsel %vm2596, %v2598, %v2594
    %v2600 = vmul.f32 1.0, %v2599
    %v2601 = vrcp.pop %v2523
    %v2602 = vmul.f32 %v2523, %v2601
    %v2603 = vsub.f32 1.0, %v2602
    %v2604 = vmul.f32 %v2601, %v2603
    %v2605 = vadd.f32 %v2601, %v2604
    %vm2606 = vweird.f32 %v2523
    %vm2607 = vweird.f32 %v2601
    %vm2608 = vmor %vm2606, %vm2607
    %v2609 = vsel %vm2608, %v2601, %v2605
    %v2610 = vand.u32 2147483647, %v2523
    %vm2611 = vcmp.eq.f32.partialorder %v2610, 8.507059e+37
    %v2612 = vand.u32 %v2523, 2147483648
    %v2613 = vor.u32 1.1754944e-38, %v2612
    %v2614 = vsel %vm2611, %v2613, %v2609
    %v2615 = vmul.f32 1.0, %v2614
    %v2616 = vrcp.pop %v2524
    %v2617 = vmul.f32 %v2524, %v2616
    %v2618 = vsub.f32 1.0, %v2617
    %v2619 = vmul.f32 %v2616, %v2618
    %v2620 = vadd.f32 %v2616, %v2619
    %vm2621 = vweird.f32 %v2524
    %vm2622 = vweird.f32 %v2616
    %vm2623 = vmor %vm2621, %vm2622
    %v2624 = vsel %vm2623, %v2616, %v2620
    %v2625 = vand.u32 2147483647, %v2524
    %vm2626 = vcmp.eq.f32.partialorder %v2625, 8.507059e+37
    %v2627 = vand.u32 %v2524, 2147483648
    %v2628 = vor.u32 1.1754944e-38, %v2627
    %v2629 = vsel %vm2626, %v2628, %v2624
    %v2630 = vmul.f32 1.0, %v2629
    %v2631 = vrcp.pop %v2525
    %v2632 = vmul.f32 %v2525, %v2631
    %v2633 = vsub.f32 1.0, %v2632
    %v2634 = vmul.f32 %v2631, %v2633
    %v2635 = vadd.f32 %v2631, %v2634
    %vm2636 = vweird.f32 %v2525
    %vm2637 = vweird.f32 %v2631
    %vm2638 = vmor %vm2636, %vm2637
    %v2639 = vsel %vm2638, %v2631, %v2635
    %v2640 = vand.u32 2147483647, %v2525
    %vm2641 = vcmp.eq.f32.partialorder %v2640, 8.507059e+37
    %v2642 = vand.u32 %v2525, 2147483648
    %v2643 = vor.u32 1.1754944e-38, %v2642
    %v2644 = vsel %vm2641, %v2643, %v2639
    %v2645 = vmul.f32 1.0, %v2644
    %v2646 = vpack.c.bf16 %v2555, %v2540
    %v2647 = vpack.c.bf16 %v2585, %v2570
    %v2648 = vpack.c.bf16 %v2615, %v2600
    %v2649 = vpack.c.bf16 %v2645, %v2630
    %v2654 = vrot.slane %v2646, 3
    %v2655 = vrot.slane %v2647, 6
    %v2656 = vrot.slane %v2647, 1
    %v2657 = vrot.slane %v2648, 4
    %v2658 = vrot.slane %v2648, 7
    %v2659 = vrot.slane %v2649, 2
    %v2660 = vrot.slane %v2649, 5
    %vm2661 = vcmask 1040384
    %v2664 = vsel %vm2661, %v2646, %v2654
    %vm2665 = vcmask 1042434
    %v2668 = vsel %vm2665, %v2655, %v2656
    %vm2669 = vcmask 1041408
    %v2670 = vsel %vm2669, %v2664, %v2668
    %vm2671 = vcmask 1044484
    %v2674 = vsel %vm2671, %v2657, %v2658
    %vm2675 = vcmask 1046534
    %v2678 = vsel %vm2675, %v2659, %v2660
    %vm2679 = vcmask 1045508
    %v2680 = vsel %vm2679, %v2674, %v2678
    %v2681 = vsel %vm307, %v2670, %v2680
    %2683 = vst [vmem:[#allocation13] sm:$0xff] %v2681
    // Predicated region
    $region78: #{vae_inv_forward.1} parent=1 // pred_check
      _
    $region79: #{vae_inv_forward.1} parent=1 // pred_check_branch
      %2685 = sbr.rel (0) target = $region81
    $region80: #{vae_inv_forward.1} parent=1 // pred_region
      _
    $region81: #{vae_inv_forward.1} parent=1 // pred_fallthru
      _
    // Predicated region
    $region82: #{vae_inv_forward.1} parent=1 // pred_check
      _
    $region83: #{vae_inv_forward.1} parent=1 // pred_check_branch
      %2687 = sbr.rel (0) target = $region85
    $region84: #{vae_inv_forward.1} parent=1 // pred_region
      %2689 = vsyncadd [#allocation4], 0
      %s2691 = sshll.u32 [#allocation13], 4
      %s2692 = int_to_ptr.vmem [resolvable:$true] %s2691
      %s2693 = sshll.u32 %s14, 4
      %s2694 = int_to_ptr.hbm [resolvable:$true] %s2693
      %2696 = dma.vmem_to_hbm [thread:$0]  %s2692, 128, %s2694, [#allocation4]
    $region85: #{vae_inv_forward.1} parent=1 // pred_fallthru
      _
    // Predicated region
    $region86: #{vae_inv_forward.1} parent=1 // pred_check
      _
    $region87: #{vae_inv_forward.1} parent=1 // pred_check_branch
      %2698 = sbr.rel (0) target = $region89
    $region88: #{vae_inv_forward.1} parent=1 // pred_region
      _
    $region89: #{vae_inv_forward.1} parent=1 // pred_fallthru
      _
    // Predicated region
    $region90: #{vae_inv_forward.1} parent=1 // pred_check
      _
    $region91: #{vae_inv_forward.1} parent=1 // pred_check_branch
      %2700 = sbr.rel (0) target = $region93
    $region92: #{vae_inv_forward.1} parent=1 // pred_region
      %2702 = dma.done [#allocation4], 128
    $region93: #{vae_inv_forward.1} parent=1 // pred_fallthru
      _
    %2703 = vsyncpa [#allocation3], 1
    %2704 = vsyncpa [#allocation6], 1
    %2705 = vsyncpa [#allocation9], 1
    %2706 = vsyncpa [#allocation12], 1
    %2707 = vsyncpa [#allocation4], 1

</llo_original>
